<compile_context>
chip_gen: v6e
topology: v6e:2x2x1
jax: 0.10.0
libtpu: 0.0.40
codegen_flags: <defaults>
</compile_context>

<pallas_src>
import functools

import numpy as np
import jax
import jax.numpy as jnp
from jax.experimental import pallas as pl
from jax.experimental.pallas import tpu as pltpu


# ----------------------------------------------------------------------------
# Fused Pallas kernel
# ----------------------------------------------------------------------------

def gnn_fused_kernel(x_ref, adj_ref, pool_ref,
                     w1_ref, s1_ref, b1_ref,
                     w2_ref, s2_ref, b2_ref,
                     w3_ref, b3_ref,
                     fc1w_ref, fc1b_ref,
                     fc2w_ref, fc2b_ref,
                     fc3w_ref, fc3b_ref,
                     out_ref, *, heads, out_ch):
    hc = heads * out_ch
    neg_big = jnp.float32(-1e30)   # f32 path only (never cast to bf16)

    # Additive softmax mask, built and broadcast to all heads ONCE and shared
    # by all three GAT layers (every row has a self-loop, so no row is fully
    # masked and the softmax denominator is always > 0).
    adj = adj_ref[...]                                                # [N, N]
    n = adj.shape[0]
    mask_bias = jnp.where(adj > 0.0, jnp.float32(0.0), neg_big)      # [N, N]
    mask_h = jnp.broadcast_to(mask_bias[None, :, :], (heads, n, n))  # [H, N, N]

    def gat(x, w_ext):
        # One MXU matmul yields per-head features AND folded attention scores.
        zext = jnp.dot(x, w_ext, preferred_element_type=jnp.float32)  # [N, HC+2H]
        z = zext[:, :hc]                                              # [N, H*C]
        a_s = jnp.transpose(zext[:, hc:hc + heads])                   # [H, N] (a_src . z_j)
        a_d = jnp.transpose(zext[:, hc + heads:hc + 2 * heads])       # [H, N] (a_dst . z_i)

        # All heads batched: e[h, i, j] = LeakyReLU(a_d[h, i] + a_s[h, j])
        e = a_d[:, :, None] + a_s[:, None, :]                         # [H, N, N]
        e = jnp.where(e > 0.0, e, 0.2 * e)                            # LeakyReLU(0.2)
        e = e + mask_h                                                # mask non-edges
        e = e - jnp.max(e, axis=-1, keepdims=True)                    # softmax over j
        p = jnp.exp(e)
        alpha = p * pl.reciprocal(jnp.sum(p, axis=-1, keepdims=True), approx=True)

        # Per-head aggregation on the MXU (static lane slices); caller
        # concatenates / averages so downstream activations stay lane-dense.
        return [jnp.dot(alpha[h], z[:, h * out_ch:(h + 1) * out_ch],
                        preferred_element_type=jnp.float32)
                for h in range(heads)]

    x = x_ref[...]

    # conv1 -> bn1 -> relu   (BN scale/shift folded; conv bias folded into shift)
    h = jnp.concatenate(gat(x, w1_ref[...]), axis=-1)                 # [N, H*C]
    h = jnp.maximum(h * s1_ref[...] + b1_ref[...], 0.0)

    # conv2 -> bn2 -> relu
    h = jnp.concatenate(gat(h, w2_ref[...]), axis=-1)
    h = jnp.maximum(h * s2_ref[...] + b2_ref[...], 0.0)

    # conv3 (concat=False -> mean over heads) + bias -> relu
    outs3 = gat(h, w3_ref[...])
    acc = outs3[0]
    for o in outs3[1:]:
        acc = acc + o
    h = jnp.maximum(acc * jnp.float32(1.0 / heads) + b3_ref[...], 0.0)  # [N, C]

    # global_mean_pool (dense matmul) fused with fc1/relu/fc2/relu/fc3
    g = jnp.dot(pool_ref[...], h, preferred_element_type=jnp.float32)   # [G, C]
    g = jnp.maximum(jnp.dot(g, fc1w_ref[...], preferred_element_type=jnp.float32)
                    + fc1b_ref[...], 0.0)                                # [G, 256]
    g = jnp.maximum(jnp.dot(g, fc2w_ref[...], preferred_element_type=jnp.float32)
                    + fc2b_ref[...], 0.0)                                # [G, 64]
    out_ref[...] = (jnp.dot(g, fc3w_ref[...], preferred_element_type=jnp.float32)
                    + fc3b_ref[...])                                     # [G, 128] padded


# ----------------------------------------------------------------------------
# Wrapper: parameter folding + single pallas_call
# ----------------------------------------------------------------------------

OUT_PAD = 128   # lane-dense final store; sliced back to output_dim in wrapper


def _fold_attention_into_weights(w, att_src, att_dst, heads, out_ch):
    """[Fin, H*C] -> [Fin, H*C + 2H] with columns W_h@a_src_h and W_h@a_dst_h."""
    fin = w.shape[0]
    w_h = w.reshape(fin, heads, out_ch)
    w_as = jnp.einsum("fhc,hc->fh", w_h, att_src.reshape(heads, out_ch))
    w_ad = jnp.einsum("fhc,hc->fh", w_h, att_dst.reshape(heads, out_ch))
    return jnp.concatenate([w, w_as, w_ad], axis=1)


def gnn_forward(p, x, adj, pool_mat, *, heads, hidden, output_dim):
    eps = 1e-5
    hc = heads * hidden
    g = pool_mat.shape[0]

    # Attention vectors folded into the linear weights (scores are linear in x).
    w1 = _fold_attention_into_weights(p["w1"], p["as1"], p["ad1"], heads, hidden)
    w2 = _fold_attention_into_weights(p["w2"], p["as2"], p["ad2"], heads, hidden)
    w3 = _fold_attention_into_weights(p["w3"], p["as3"], p["ad3"], heads, hidden)

    # BatchNorm eval-mode folding (running_mean=0, running_var=1) with the
    # GATConv bias absorbed into the shift.
    scale1 = p["bn1_g"] / jnp.sqrt(1.0 + eps)
    shift1 = p["cb1"] * scale1 + p["bn1_b"]
    scale2 = p["bn2_g"] / jnp.sqrt(1.0 + eps)
    shift2 = p["cb2"] * scale2 + p["bn2_b"]

    # Pad fc3 to 128 output lanes so the final store is unmasked.
    fc3_w = jnp.zeros((p["fc3_w"].shape[0], OUT_PAD), jnp.float32)
    fc3_w = fc3_w.at[:, :output_dim].set(p["fc3_w"])
    fc3_b = jnp.zeros((1, OUT_PAD), jnp.float32)
    fc3_b = fc3_b.at[:, :output_dim].set(p["fc3_b"].reshape(1, -1))

    kernel = functools.partial(gnn_fused_kernel, heads=heads, out_ch=hidden)
    out = pl.pallas_call(
        kernel,
        out_shape=jax.ShapeDtypeStruct((g, OUT_PAD), jnp.float32),
        compiler_params=pltpu.CompilerParams(vmem_limit_bytes=32 * 1024 * 1024),
    )(
        x, adj, pool_mat,
        w1, scale1.reshape(1, hc), shift1.reshape(1, hc),
        w2, scale2.reshape(1, hc), shift2.reshape(1, hc),
        w3, p["cb3"].reshape(1, hidden),
        p["fc1_w"], p["fc1_b"].reshape(1, -1),
        p["fc2_w"], p["fc2_b"].reshape(1, -1),
        fc3_w, fc3_b,
    )
    return out[:, :output_dim]


# ----------------------------------------------------------------------------
# Pure-JAX reference (eval mode), for correctness checking
# ----------------------------------------------------------------------------

def gnn_reference(p, x, adj, pool_mat, *, heads, hidden, output_dim):
    eps = 1e-5
    n = x.shape[0]

    def gat(h, w, a_src, a_dst, concat):
        z = h @ w                                                     # [N, H*C]
        zh = z.reshape(n, heads, hidden)                              # [N, H, C]
        a_s = jnp.einsum("nhc,hc->nh", zh, a_src.reshape(heads, hidden))
        a_d = jnp.einsum("nhc,hc->nh", zh, a_dst.reshape(heads, hidden))
        e = a_d.T[:, :, None] + a_s.T[:, None, :]                     # [H, N(dst), N(src)]
        e = jnp.where(e > 0.0, e, 0.2 * e)
        e = jnp.where(adj[None, :, :] > 0.0, e, -jnp.inf)
        alpha = jax.nn.softmax(e, axis=-1)
        out = jnp.einsum("hij,jhc->ihc", alpha, zh)                   # [N, H, C]
        return out.reshape(n, heads * hidden) if concat else out.mean(axis=1)

    h = gat(x, p["w1"], p["as1"], p["ad1"], True) + p["cb1"]
    h = jax.nn.relu(h / jnp.sqrt(1.0 + eps) * p["bn1_g"] + p["bn1_b"])
    h = gat(h, p["w2"], p["as2"], p["ad2"], True) + p["cb2"]
    h = jax.nn.relu(h / jnp.sqrt(1.0 + eps) * p["bn2_g"] + p["bn2_b"])
    h = jax.nn.relu(gat(h, p["w3"], p["as3"], p["ad3"], False) + p["cb3"])
    g = pool_mat @ h
    g = jax.nn.relu(g @ p["fc1_w"] + p["fc1_b"])
    g = jax.nn.relu(g @ p["fc2_w"] + p["fc2_b"])
    return g @ p["fc3_w"] + p["fc3_b"]


# ----------------------------------------------------------------------------
# Deterministic setup + run
# ----------------------------------------------------------------------------

def init_params(key, input_dim, hidden, heads, output_dim):
    hc = heads * hidden
    names_shapes = [
        ("w1", (input_dim, hc)), ("as1", (hc,)), ("ad1", (hc,)), ("cb1", (hc,)),
        ("w2", (hc, hc)),        ("as2", (hc,)), ("ad2", (hc,)), ("cb2", (hc,)),
        ("w3", (hc, hc)),        ("as3", (hc,)), ("ad3", (hc,)), ("cb3", (hidden,)),
        ("bn1_g", (hc,)), ("bn1_b", (hc,)),
        ("bn2_g", (hc,)), ("bn2_b", (hc,)),
        ("fc1_w", (hidden, 256)), ("fc1_b", (256,)),
        ("fc2_w", (256, 64)),     ("fc2_b", (64,)),
        ("fc3_w", (64, output_dim)), ("fc3_b", (output_dim,)),
    ]
    params = {}
    for name, shape in names_shapes:
        key, sub = jax.random.split(key)
        params[name] = 0.1 * jax.random.normal(sub, shape, dtype=jnp.float32)
    params["bn1_g"] = 1.0 + params["bn1_g"]   # gamma ~ 1 (PyTorch default) + jitter
    params["bn2_g"] = 1.0 + params["bn2_g"]
    return params


if __name__ == "__main__":
    key = jax.random.PRNGKey(0)

    # Small shapes: 2 graphs x 8 nodes, input_dim=8, hidden_dim=32, heads=4
    # (so H*C = 128 activations stay lane-dense).
    N, G = 16, 2
    input_dim, hidden, heads, output_dim = 8, 32, 4, 1
    nodes_per_graph = N // G

    key, kx = jax.random.split(key)
    x = jax.random.normal(kx, (N, input_dim), dtype=jnp.float32)

    # Bidirectional ring inside each graph + self loops (add_self_loops=True).
    adj_np = np.zeros((N, N), dtype=np.float32)
    for gi in range(G):
        base = gi * nodes_per_graph
        for k in range(nodes_per_graph):
            s = base + k
            d = base + (k + 1) % nodes_per_graph
            adj_np[d, s] = 1.0   # edge s -> d
            adj_np[s, d] = 1.0   # edge d -> s
    np.fill_diagonal(adj_np, 1.0)
    adj = jnp.asarray(adj_np)

    # Dense global_mean_pool matrix from the `batch` assignment.
    batch = np.repeat(np.arange(G), nodes_per_graph)
    pm_np = np.zeros((G, N), dtype=np.float32)
    for gi in range(G):
        members = batch == gi
        pm_np[gi, members] = 1.0 / members.sum()
    pool_mat = jnp.asarray(pm_np)

    params = init_params(key, input_dim, hidden, heads, output_dim)

    fwd = jax.jit(functools.partial(gnn_forward, heads=heads, hidden=hidden,
                                    output_dim=output_dim))
    out = fwd(params, x, adj, pool_mat)
    out = jax.block_until_ready(out)
    assert out.shape == (G, output_dim), out.shape
    assert bool(jnp.all(jnp.isfinite(out)))

    # Correctness vs. pure-JAX reference (loose tolerance: approx reciprocal).
    ref = gnn_reference(params, x, adj, pool_mat, heads=heads, hidden=hidden,
                        output_dim=output_dim)
    err = float(jnp.max(jnp.abs(out - ref)))
    assert err < 5e-3, f"max abs err {err}"

    print("KERNEL_OK")
</pallas_src>

<mosaic_0001>
module attributes {stable_mosaic.version = 11 : i64} {
  func.func @gnn_fused_kernel(%arg0: memref<16x8xf32, #tpu.memory_space<vmem>>, %arg1: memref<16x16xf32, #tpu.memory_space<vmem>>, %arg2: memref<2x16xf32, #tpu.memory_space<vmem>>, %arg3: memref<8x136xf32, #tpu.memory_space<vmem>>, %arg4: memref<1x128xf32, #tpu.memory_space<vmem>>, %arg5: memref<1x128xf32, #tpu.memory_space<vmem>>, %arg6: memref<128x136xf32, #tpu.memory_space<vmem>>, %arg7: memref<1x128xf32, #tpu.memory_space<vmem>>, %arg8: memref<1x128xf32, #tpu.memory_space<vmem>>, %arg9: memref<128x136xf32, #tpu.memory_space<vmem>>, %arg10: memref<1x32xf32, #tpu.memory_space<vmem>>, %arg11: memref<32x256xf32, #tpu.memory_space<vmem>>, %arg12: memref<1x256xf32, #tpu.memory_space<vmem>>, %arg13: memref<256x64xf32, #tpu.memory_space<vmem>>, %arg14: memref<1x64xf32, #tpu.memory_space<vmem>>, %arg15: memref<64x128xf32, #tpu.memory_space<vmem>>, %arg16: memref<1x128xf32, #tpu.memory_space<vmem>>, %arg17: memref<2x128xf32, #tpu.memory_space<vmem>>) attributes {dimension_semantics = [], scalar_prefetch = 0 : i64, scratch_operands = 0 : i64, tpu.core_type = #tpu.core_type<tc>} {
    %c0 = arith.constant 0 : index
    %c0_0 = arith.constant 0 : index
    %0 = vector.load %arg1[%c0, %c0_0] : memref<16x16xf32, #tpu.memory_space<vmem>>, vector<16x16xf32>
    %cst = arith.constant 0.000000e+00 : f32
    %1 = vector.broadcast %cst : f32 to vector<16x16xf32>
    %2 = arith.cmpf ogt, %0, %1 : vector<16x16xf32>
    %cst_1 = arith.constant 0.000000e+00 : f32
    %cst_2 = arith.constant -1.000000e+30 : f32
    %3 = vector.broadcast %cst_1 : f32 to vector<16x16xf32>
    %4 = vector.broadcast %cst_2 : f32 to vector<16x16xf32>
    %5 = arith.select %2, %3, %4 : vector<16x16xi1>, vector<16x16xf32>
    %6 = vector.shape_cast %5 : vector<16x16xf32> to vector<1x16x16xf32>
    %7 = vector.shape_cast %6 : vector<1x16x16xf32> to vector<1x16x16xf32>
    %8 = vector.broadcast %7 : vector<1x16x16xf32> to vector<4x16x16xf32>
    %c0_3 = arith.constant 0 : index
    %c0_4 = arith.constant 0 : index
    %9 = vector.load %arg0[%c0_3, %c0_4] : memref<16x8xf32, #tpu.memory_space<vmem>>, vector<16x8xf32>
    %c0_5 = arith.constant 0 : index
    %c0_6 = arith.constant 0 : index
    %10 = vector.load %arg3[%c0_5, %c0_6] : memref<8x136xf32, #tpu.memory_space<vmem>>, vector<8x136xf32>
    %cst_7 = arith.constant dense<0.000000e+00> : vector<16x136xf32>
    %11 = tpu.matmul %9, %10, %cst_7 {dimension_numbers = #tpu.dot_dimension_numbers<[1], [0], [0], [1], [0, 0, 1, 1], [], []>} : vector<16x8xf32>, vector<8x136xf32>, vector<16x136xf32> -> vector<16x136xf32>
    %12 = vector.extract_strided_slice %11 {offsets = [0, 0], sizes = [16, 128], strides = [1, 1]} : vector<16x136xf32> to vector<16x128xf32>
    %13 = vector.extract_strided_slice %11 {offsets = [0, 128], sizes = [16, 4], strides = [1, 1]} : vector<16x136xf32> to vector<16x4xf32>
    %14 = tpu.transpose %13, [1, 0] : vector<16x4xf32> -> vector<4x16xf32>
    %15 = vector.extract_strided_slice %11 {offsets = [0, 132], sizes = [16, 4], strides = [1, 1]} : vector<16x136xf32> to vector<16x4xf32>
    %16 = tpu.transpose %15, [1, 0] : vector<16x4xf32> -> vector<4x16xf32>
    %17 = vector.shape_cast %16 : vector<4x16xf32> to vector<4x16x1xf32>
    %18 = vector.shape_cast %14 : vector<4x16xf32> to vector<4x1x16xf32>
    %19 = vector.broadcast %17 : vector<4x16x1xf32> to vector<4x16x16xf32>
    %20 = vector.broadcast %18 : vector<4x1x16xf32> to vector<4x16x16xf32>
    %21 = arith.addf %19, %20 : vector<4x16x16xf32>
    %cst_8 = arith.constant 0.000000e+00 : f32
    %22 = vector.broadcast %cst_8 : f32 to vector<4x16x16xf32>
    %23 = arith.cmpf ogt, %21, %22 : vector<4x16x16xf32>
    %cst_9 = arith.constant 2.000000e-01 : f32
    %24 = vector.broadcast %cst_9 : f32 to vector<4x16x16xf32>
    %25 = arith.mulf %24, %21 : vector<4x16x16xf32>
    %26 = arith.select %23, %21, %25 : vector<4x16x16xi1>, vector<4x16x16xf32>
    %27 = arith.addf %26, %8 : vector<4x16x16xf32>
    %cst_10 = arith.constant dense<0xFF800000> : vector<4x16xf32>
    %28 = vector.multi_reduction <maximumf>, %27, %cst_10 [2] : vector<4x16x16xf32> to vector<4x16xf32>
    %29 = vector.shape_cast %28 : vector<4x16xf32> to vector<4x16x1xf32>
    %30 = vector.broadcast %29 : vector<4x16x1xf32> to vector<4x16x16xf32>
    %31 = arith.subf %27, %30 : vector<4x16x16xf32>
    %32 = math.exp %31 : vector<4x16x16xf32>
    %cst_11 = arith.constant dense<0.000000e+00> : vector<4x16xf32>
    %33 = vector.multi_reduction <add>, %32, %cst_11 [2] : vector<4x16x16xf32> to vector<4x16xf32>
    %34 = vector.shape_cast %33 : vector<4x16xf32> to vector<4x16x1xf32>
    %35 = tpu.reciprocal %34 {approx = true} : vector<4x16x1xf32> -> vector<4x16x1xf32>
    %36 = vector.broadcast %35 : vector<4x16x1xf32> to vector<4x16x16xf32>
    %37 = arith.mulf %32, %36 : vector<4x16x16xf32>
    %38 = vector.extract_strided_slice %37 {offsets = [0, 0, 0], sizes = [1, 16, 16], strides = [1, 1, 1]} : vector<4x16x16xf32> to vector<1x16x16xf32>
    %39 = vector.shape_cast %38 : vector<1x16x16xf32> to vector<16x16xf32>
    %40 = vector.extract_strided_slice %12 {offsets = [0, 0], sizes = [16, 32], strides = [1, 1]} : vector<16x128xf32> to vector<16x32xf32>
    %cst_12 = arith.constant dense<0.000000e+00> : vector<16x32xf32>
    %41 = tpu.matmul %39, %40, %cst_12 {dimension_numbers = #tpu.dot_dimension_numbers<[1], [0], [0], [1], [0, 0, 1, 1], [], []>} : vector<16x16xf32>, vector<16x32xf32>, vector<16x32xf32> -> vector<16x32xf32>
    %42 = vector.extract_strided_slice %37 {offsets = [1, 0, 0], sizes = [1, 16, 16], strides = [1, 1, 1]} : vector<4x16x16xf32> to vector<1x16x16xf32>
    %43 = vector.shape_cast %42 : vector<1x16x16xf32> to vector<16x16xf32>
    %44 = vector.extract_strided_slice %12 {offsets = [0, 32], sizes = [16, 32], strides = [1, 1]} : vector<16x128xf32> to vector<16x32xf32>
    %cst_13 = arith.constant dense<0.000000e+00> : vector<16x32xf32>
    %45 = tpu.matmul %43, %44, %cst_13 {dimension_numbers = #tpu.dot_dimension_numbers<[1], [0], [0], [1], [0, 0, 1, 1], [], []>} : vector<16x16xf32>, vector<16x32xf32>, vector<16x32xf32> -> vector<16x32xf32>
    %46 = vector.extract_strided_slice %37 {offsets = [2, 0, 0], sizes = [1, 16, 16], strides = [1, 1, 1]} : vector<4x16x16xf32> to vector<1x16x16xf32>
    %47 = vector.shape_cast %46 : vector<1x16x16xf32> to vector<16x16xf32>
    %48 = vector.extract_strided_slice %12 {offsets = [0, 64], sizes = [16, 32], strides = [1, 1]} : vector<16x128xf32> to vector<16x32xf32>
    %cst_14 = arith.constant dense<0.000000e+00> : vector<16x32xf32>
    %49 = tpu.matmul %47, %48, %cst_14 {dimension_numbers = #tpu.dot_dimension_numbers<[1], [0], [0], [1], [0, 0, 1, 1], [], []>} : vector<16x16xf32>, vector<16x32xf32>, vector<16x32xf32> -> vector<16x32xf32>
    %50 = vector.extract_strided_slice %37 {offsets = [3, 0, 0], sizes = [1, 16, 16], strides = [1, 1, 1]} : vector<4x16x16xf32> to vector<1x16x16xf32>
    %51 = vector.shape_cast %50 : vector<1x16x16xf32> to vector<16x16xf32>
    %52 = vector.extract_strided_slice %12 {offsets = [0, 96], sizes = [16, 32], strides = [1, 1]} : vector<16x128xf32> to vector<16x32xf32>
    %cst_15 = arith.constant dense<0.000000e+00> : vector<16x32xf32>
    %53 = tpu.matmul %51, %52, %cst_15 {dimension_numbers = #tpu.dot_dimension_numbers<[1], [0], [0], [1], [0, 0, 1, 1], [], []>} : vector<16x16xf32>, vector<16x32xf32>, vector<16x32xf32> -> vector<16x32xf32>
    %54 = tpu.concatenate %41, %45, %49, %53 in 1 : vector<16x32xf32>, vector<16x32xf32>, vector<16x32xf32>, vector<16x32xf32> -> vector<16x128xf32>
    %c0_16 = arith.constant 0 : index
    %c0_17 = arith.constant 0 : index
    %55 = vector.load %arg4[%c0_16, %c0_17] : memref<1x128xf32, #tpu.memory_space<vmem>>, vector<1x128xf32>
    %56 = vector.broadcast %55 : vector<1x128xf32> to vector<16x128xf32>
    %57 = arith.mulf %54, %56 : vector<16x128xf32>
    %c0_18 = arith.constant 0 : index
    %c0_19 = arith.constant 0 : index
    %58 = vector.load %arg5[%c0_18, %c0_19] : memref<1x128xf32, #tpu.memory_space<vmem>>, vector<1x128xf32>
    %59 = vector.broadcast %58 : vector<1x128xf32> to vector<16x128xf32>
    %60 = arith.addf %57, %59 : vector<16x128xf32>
    %cst_20 = arith.constant 0.000000e+00 : f32
    %61 = vector.broadcast %cst_20 : f32 to vector<16x128xf32>
    %62 = arith.maximumf %60, %61 : vector<16x128xf32>
    %c0_21 = arith.constant 0 : index
    %c0_22 = arith.constant 0 : index
    %63 = vector.load %arg6[%c0_21, %c0_22] : memref<128x136xf32, #tpu.memory_space<vmem>>, vector<128x136xf32>
    %cst_23 = arith.constant dense<0.000000e+00> : vector<16x136xf32>
    %64 = tpu.matmul %62, %63, %cst_23 {dimension_numbers = #tpu.dot_dimension_numbers<[1], [0], [0], [1], [0, 0, 1, 1], [], []>} : vector<16x128xf32>, vector<128x136xf32>, vector<16x136xf32> -> vector<16x136xf32>
    %65 = vector.extract_strided_slice %64 {offsets = [0, 0], sizes = [16, 128], strides = [1, 1]} : vector<16x136xf32> to vector<16x128xf32>
    %66 = vector.extract_strided_slice %64 {offsets = [0, 128], sizes = [16, 4], strides = [1, 1]} : vector<16x136xf32> to vector<16x4xf32>
    %67 = tpu.transpose %66, [1, 0] : vector<16x4xf32> -> vector<4x16xf32>
    %68 = vector.extract_strided_slice %64 {offsets = [0, 132], sizes = [16, 4], strides = [1, 1]} : vector<16x136xf32> to vector<16x4xf32>
    %69 = tpu.transpose %68, [1, 0] : vector<16x4xf32> -> vector<4x16xf32>
    %70 = vector.shape_cast %69 : vector<4x16xf32> to vector<4x16x1xf32>
    %71 = vector.shape_cast %67 : vector<4x16xf32> to vector<4x1x16xf32>
    %72 = vector.broadcast %70 : vector<4x16x1xf32> to vector<4x16x16xf32>
    %73 = vector.broadcast %71 : vector<4x1x16xf32> to vector<4x16x16xf32>
    %74 = arith.addf %72, %73 : vector<4x16x16xf32>
    %cst_24 = arith.constant 0.000000e+00 : f32
    %75 = vector.broadcast %cst_24 : f32 to vector<4x16x16xf32>
    %76 = arith.cmpf ogt, %74, %75 : vector<4x16x16xf32>
    %cst_25 = arith.constant 2.000000e-01 : f32
    %77 = vector.broadcast %cst_25 : f32 to vector<4x16x16xf32>
    %78 = arith.mulf %77, %74 : vector<4x16x16xf32>
    %79 = arith.select %76, %74, %78 : vector<4x16x16xi1>, vector<4x16x16xf32>
    %80 = arith.addf %79, %8 : vector<4x16x16xf32>
    %cst_26 = arith.constant dense<0xFF800000> : vector<4x16xf32>
    %81 = vector.multi_reduction <maximumf>, %80, %cst_26 [2] : vector<4x16x16xf32> to vector<4x16xf32>
    %82 = vector.shape_cast %81 : vector<4x16xf32> to vector<4x16x1xf32>
    %83 = vector.broadcast %82 : vector<4x16x1xf32> to vector<4x16x16xf32>
    %84 = arith.subf %80, %83 : vector<4x16x16xf32>
    %85 = math.exp %84 : vector<4x16x16xf32>
    %cst_27 = arith.constant dense<0.000000e+00> : vector<4x16xf32>
    %86 = vector.multi_reduction <add>, %85, %cst_27 [2] : vector<4x16x16xf32> to vector<4x16xf32>
    %87 = vector.shape_cast %86 : vector<4x16xf32> to vector<4x16x1xf32>
    %88 = tpu.reciprocal %87 {approx = true} : vector<4x16x1xf32> -> vector<4x16x1xf32>
    %89 = vector.broadcast %88 : vector<4x16x1xf32> to vector<4x16x16xf32>
    %90 = arith.mulf %85, %89 : vector<4x16x16xf32>
    %91 = vector.extract_strided_slice %90 {offsets = [0, 0, 0], sizes = [1, 16, 16], strides = [1, 1, 1]} : vector<4x16x16xf32> to vector<1x16x16xf32>
    %92 = vector.shape_cast %91 : vector<1x16x16xf32> to vector<16x16xf32>
    %93 = vector.extract_strided_slice %65 {offsets = [0, 0], sizes = [16, 32], strides = [1, 1]} : vector<16x128xf32> to vector<16x32xf32>
    %cst_28 = arith.constant dense<0.000000e+00> : vector<16x32xf32>
    %94 = tpu.matmul %92, %93, %cst_28 {dimension_numbers = #tpu.dot_dimension_numbers<[1], [0], [0], [1], [0, 0, 1, 1], [], []>} : vector<16x16xf32>, vector<16x32xf32>, vector<16x32xf32> -> vector<16x32xf32>
    %95 = vector.extract_strided_slice %90 {offsets = [1, 0, 0], sizes = [1, 16, 16], strides = [1, 1, 1]} : vector<4x16x16xf32> to vector<1x16x16xf32>
    %96 = vector.shape_cast %95 : vector<1x16x16xf32> to vector<16x16xf32>
    %97 = vector.extract_strided_slice %65 {offsets = [0, 32], sizes = [16, 32], strides = [1, 1]} : vector<16x128xf32> to vector<16x32xf32>
    %cst_29 = arith.constant dense<0.000000e+00> : vector<16x32xf32>
    %98 = tpu.matmul %96, %97, %cst_29 {dimension_numbers = #tpu.dot_dimension_numbers<[1], [0], [0], [1], [0, 0, 1, 1], [], []>} : vector<16x16xf32>, vector<16x32xf32>, vector<16x32xf32> -> vector<16x32xf32>
    %99 = vector.extract_strided_slice %90 {offsets = [2, 0, 0], sizes = [1, 16, 16], strides = [1, 1, 1]} : vector<4x16x16xf32> to vector<1x16x16xf32>
    %100 = vector.shape_cast %99 : vector<1x16x16xf32> to vector<16x16xf32>
    %101 = vector.extract_strided_slice %65 {offsets = [0, 64], sizes = [16, 32], strides = [1, 1]} : vector<16x128xf32> to vector<16x32xf32>
    %cst_30 = arith.constant dense<0.000000e+00> : vector<16x32xf32>
    %102 = tpu.matmul %100, %101, %cst_30 {dimension_numbers = #tpu.dot_dimension_numbers<[1], [0], [0], [1], [0, 0, 1, 1], [], []>} : vector<16x16xf32>, vector<16x32xf32>, vector<16x32xf32> -> vector<16x32xf32>
    %103 = vector.extract_strided_slice %90 {offsets = [3, 0, 0], sizes = [1, 16, 16], strides = [1, 1, 1]} : vector<4x16x16xf32> to vector<1x16x16xf32>
    %104 = vector.shape_cast %103 : vector<1x16x16xf32> to vector<16x16xf32>
    %105 = vector.extract_strided_slice %65 {offsets = [0, 96], sizes = [16, 32], strides = [1, 1]} : vector<16x128xf32> to vector<16x32xf32>
    %cst_31 = arith.constant dense<0.000000e+00> : vector<16x32xf32>
    %106 = tpu.matmul %104, %105, %cst_31 {dimension_numbers = #tpu.dot_dimension_numbers<[1], [0], [0], [1], [0, 0, 1, 1], [], []>} : vector<16x16xf32>, vector<16x32xf32>, vector<16x32xf32> -> vector<16x32xf32>
    %107 = tpu.concatenate %94, %98, %102, %106 in 1 : vector<16x32xf32>, vector<16x32xf32>, vector<16x32xf32>, vector<16x32xf32> -> vector<16x128xf32>
    %c0_32 = arith.constant 0 : index
    %c0_33 = arith.constant 0 : index
    %108 = vector.load %arg7[%c0_32, %c0_33] : memref<1x128xf32, #tpu.memory_space<vmem>>, vector<1x128xf32>
    %109 = vector.broadcast %108 : vector<1x128xf32> to vector<16x128xf32>
    %110 = arith.mulf %107, %109 : vector<16x128xf32>
    %c0_34 = arith.constant 0 : index
    %c0_35 = arith.constant 0 : index
    %111 = vector.load %arg8[%c0_34, %c0_35] : memref<1x128xf32, #tpu.memory_space<vmem>>, vector<1x128xf32>
    %112 = vector.broadcast %111 : vector<1x128xf32> to vector<16x128xf32>
    %113 = arith.addf %110, %112 : vector<16x128xf32>
    %cst_36 = arith.constant 0.000000e+00 : f32
    %114 = vector.broadcast %cst_36 : f32 to vector<16x128xf32>
    %115 = arith.maximumf %113, %114 : vector<16x128xf32>
    %c0_37 = arith.constant 0 : index
    %c0_38 = arith.constant 0 : index
    %116 = vector.load %arg9[%c0_37, %c0_38] : memref<128x136xf32, #tpu.memory_space<vmem>>, vector<128x136xf32>
    %cst_39 = arith.constant dense<0.000000e+00> : vector<16x136xf32>
    %117 = tpu.matmul %115, %116, %cst_39 {dimension_numbers = #tpu.dot_dimension_numbers<[1], [0], [0], [1], [0, 0, 1, 1], [], []>} : vector<16x128xf32>, vector<128x136xf32>, vector<16x136xf32> -> vector<16x136xf32>
    %118 = vector.extract_strided_slice %117 {offsets = [0, 0], sizes = [16, 128], strides = [1, 1]} : vector<16x136xf32> to vector<16x128xf32>
    %119 = vector.extract_strided_slice %117 {offsets = [0, 128], sizes = [16, 4], strides = [1, 1]} : vector<16x136xf32> to vector<16x4xf32>
    %120 = tpu.transpose %119, [1, 0] : vector<16x4xf32> -> vector<4x16xf32>
    %121 = vector.extract_strided_slice %117 {offsets = [0, 132], sizes = [16, 4], strides = [1, 1]} : vector<16x136xf32> to vector<16x4xf32>
    %122 = tpu.transpose %121, [1, 0] : vector<16x4xf32> -> vector<4x16xf32>
    %123 = vector.shape_cast %122 : vector<4x16xf32> to vector<4x16x1xf32>
    %124 = vector.shape_cast %120 : vector<4x16xf32> to vector<4x1x16xf32>
    %125 = vector.broadcast %123 : vector<4x16x1xf32> to vector<4x16x16xf32>
    %126 = vector.broadcast %124 : vector<4x1x16xf32> to vector<4x16x16xf32>
    %127 = arith.addf %125, %126 : vector<4x16x16xf32>
    %cst_40 = arith.constant 0.000000e+00 : f32
    %128 = vector.broadcast %cst_40 : f32 to vector<4x16x16xf32>
    %129 = arith.cmpf ogt, %127, %128 : vector<4x16x16xf32>
    %cst_41 = arith.constant 2.000000e-01 : f32
    %130 = vector.broadcast %cst_41 : f32 to vector<4x16x16xf32>
    %131 = arith.mulf %130, %127 : vector<4x16x16xf32>
    %132 = arith.select %129, %127, %131 : vector<4x16x16xi1>, vector<4x16x16xf32>
    %133 = arith.addf %132, %8 : vector<4x16x16xf32>
    %cst_42 = arith.constant dense<0xFF800000> : vector<4x16xf32>
    %134 = vector.multi_reduction <maximumf>, %133, %cst_42 [2] : vector<4x16x16xf32> to vector<4x16xf32>
    %135 = vector.shape_cast %134 : vector<4x16xf32> to vector<4x16x1xf32>
    %136 = vector.broadcast %135 : vector<4x16x1xf32> to vector<4x16x16xf32>
    %137 = arith.subf %133, %136 : vector<4x16x16xf32>
    %138 = math.exp %137 : vector<4x16x16xf32>
    %cst_43 = arith.constant dense<0.000000e+00> : vector<4x16xf32>
    %139 = vector.multi_reduction <add>, %138, %cst_43 [2] : vector<4x16x16xf32> to vector<4x16xf32>
    %140 = vector.shape_cast %139 : vector<4x16xf32> to vector<4x16x1xf32>
    %141 = tpu.reciprocal %140 {approx = true} : vector<4x16x1xf32> -> vector<4x16x1xf32>
    %142 = vector.broadcast %141 : vector<4x16x1xf32> to vector<4x16x16xf32>
    %143 = arith.mulf %138, %142 : vector<4x16x16xf32>
    %144 = vector.extract_strided_slice %143 {offsets = [0, 0, 0], sizes = [1, 16, 16], strides = [1, 1, 1]} : vector<4x16x16xf32> to vector<1x16x16xf32>
    %145 = vector.shape_cast %144 : vector<1x16x16xf32> to vector<16x16xf32>
    %146 = vector.extract_strided_slice %118 {offsets = [0, 0], sizes = [16, 32], strides = [1, 1]} : vector<16x128xf32> to vector<16x32xf32>
    %cst_44 = arith.constant dense<0.000000e+00> : vector<16x32xf32>
    %147 = tpu.matmul %145, %146, %cst_44 {dimension_numbers = #tpu.dot_dimension_numbers<[1], [0], [0], [1], [0, 0, 1, 1], [], []>} : vector<16x16xf32>, vector<16x32xf32>, vector<16x32xf32> -> vector<16x32xf32>
    %148 = vector.extract_strided_slice %143 {offsets = [1, 0, 0], sizes = [1, 16, 16], strides = [1, 1, 1]} : vector<4x16x16xf32> to vector<1x16x16xf32>
    %149 = vector.shape_cast %148 : vector<1x16x16xf32> to vector<16x16xf32>
    %150 = vector.extract_strided_slice %118 {offsets = [0, 32], sizes = [16, 32], strides = [1, 1]} : vector<16x128xf32> to vector<16x32xf32>
    %cst_45 = arith.constant dense<0.000000e+00> : vector<16x32xf32>
    %151 = tpu.matmul %149, %150, %cst_45 {dimension_numbers = #tpu.dot_dimension_numbers<[1], [0], [0], [1], [0, 0, 1, 1], [], []>} : vector<16x16xf32>, vector<16x32xf32>, vector<16x32xf32> -> vector<16x32xf32>
    %152 = vector.extract_strided_slice %143 {offsets = [2, 0, 0], sizes = [1, 16, 16], strides = [1, 1, 1]} : vector<4x16x16xf32> to vector<1x16x16xf32>
    %153 = vector.shape_cast %152 : vector<1x16x16xf32> to vector<16x16xf32>
    %154 = vector.extract_strided_slice %118 {offsets = [0, 64], sizes = [16, 32], strides = [1, 1]} : vector<16x128xf32> to vector<16x32xf32>
    %cst_46 = arith.constant dense<0.000000e+00> : vector<16x32xf32>
    %155 = tpu.matmul %153, %154, %cst_46 {dimension_numbers = #tpu.dot_dimension_numbers<[1], [0], [0], [1], [0, 0, 1, 1], [], []>} : vector<16x16xf32>, vector<16x32xf32>, vector<16x32xf32> -> vector<16x32xf32>
    %156 = vector.extract_strided_slice %143 {offsets = [3, 0, 0], sizes = [1, 16, 16], strides = [1, 1, 1]} : vector<4x16x16xf32> to vector<1x16x16xf32>
    %157 = vector.shape_cast %156 : vector<1x16x16xf32> to vector<16x16xf32>
    %158 = vector.extract_strided_slice %118 {offsets = [0, 96], sizes = [16, 32], strides = [1, 1]} : vector<16x128xf32> to vector<16x32xf32>
    %cst_47 = arith.constant dense<0.000000e+00> : vector<16x32xf32>
    %159 = tpu.matmul %157, %158, %cst_47 {dimension_numbers = #tpu.dot_dimension_numbers<[1], [0], [0], [1], [0, 0, 1, 1], [], []>} : vector<16x16xf32>, vector<16x32xf32>, vector<16x32xf32> -> vector<16x32xf32>
    %160 = arith.addf %147, %151 : vector<16x32xf32>
    %161 = arith.addf %160, %155 : vector<16x32xf32>
    %162 = arith.addf %161, %159 : vector<16x32xf32>
    %cst_48 = arith.constant 2.500000e-01 : f32
    %163 = vector.broadcast %cst_48 : f32 to vector<16x32xf32>
    %164 = arith.mulf %162, %163 : vector<16x32xf32>
    %c0_49 = arith.constant 0 : index
    %c0_50 = arith.constant 0 : index
    %165 = vector.load %arg10[%c0_49, %c0_50] : memref<1x32xf32, #tpu.memory_space<vmem>>, vector<1x32xf32>
    %166 = vector.broadcast %165 : vector<1x32xf32> to vector<16x32xf32>
    %167 = arith.addf %164, %166 : vector<16x32xf32>
    %cst_51 = arith.constant 0.000000e+00 : f32
    %168 = vector.broadcast %cst_51 : f32 to vector<16x32xf32>
    %169 = arith.maximumf %167, %168 : vector<16x32xf32>
    %c0_52 = arith.constant 0 : index
    %c0_53 = arith.constant 0 : index
    %170 = vector.load %arg2[%c0_52, %c0_53] : memref<2x16xf32, #tpu.memory_space<vmem>>, vector<2x16xf32>
    %cst_54 = arith.constant dense<0.000000e+00> : vector<2x32xf32>
    %171 = tpu.matmul %170, %169, %cst_54 {dimension_numbers = #tpu.dot_dimension_numbers<[1], [0], [0], [1], [0, 0, 1, 1], [], []>} : vector<2x16xf32>, vector<16x32xf32>, vector<2x32xf32> -> vector<2x32xf32>
    %c0_55 = arith.constant 0 : index
    %c0_56 = arith.constant 0 : index
    %172 = vector.load %arg11[%c0_55, %c0_56] : memref<32x256xf32, #tpu.memory_space<vmem>>, vector<32x256xf32>
    %cst_57 = arith.constant dense<0.000000e+00> : vector<2x256xf32>
    %173 = tpu.matmul %171, %172, %cst_57 {dimension_numbers = #tpu.dot_dimension_numbers<[1], [0], [0], [1], [0, 0, 1, 1], [], []>} : vector<2x32xf32>, vector<32x256xf32>, vector<2x256xf32> -> vector<2x256xf32>
    %c0_58 = arith.constant 0 : index
    %c0_59 = arith.constant 0 : index
    %174 = vector.load %arg12[%c0_58, %c0_59] : memref<1x256xf32, #tpu.memory_space<vmem>>, vector<1x256xf32>
    %175 = vector.broadcast %174 : vector<1x256xf32> to vector<2x256xf32>
    %176 = arith.addf %173, %175 : vector<2x256xf32>
    %cst_60 = arith.constant 0.000000e+00 : f32
    %177 = vector.broadcast %cst_60 : f32 to vector<2x256xf32>
    %178 = arith.maximumf %176, %177 : vector<2x256xf32>
    %c0_61 = arith.constant 0 : index
    %c0_62 = arith.constant 0 : index
    %179 = vector.load %arg13[%c0_61, %c0_62] : memref<256x64xf32, #tpu.memory_space<vmem>>, vector<256x64xf32>
    %cst_63 = arith.constant dense<0.000000e+00> : vector<2x64xf32>
    %180 = tpu.matmul %178, %179, %cst_63 {dimension_numbers = #tpu.dot_dimension_numbers<[1], [0], [0], [1], [0, 0, 1, 1], [], []>} : vector<2x256xf32>, vector<256x64xf32>, vector<2x64xf32> -> vector<2x64xf32>
    %c0_64 = arith.constant 0 : index
    %c0_65 = arith.constant 0 : index
    %181 = vector.load %arg14[%c0_64, %c0_65] : memref<1x64xf32, #tpu.memory_space<vmem>>, vector<1x64xf32>
    %182 = vector.broadcast %181 : vector<1x64xf32> to vector<2x64xf32>
    %183 = arith.addf %180, %182 : vector<2x64xf32>
    %cst_66 = arith.constant 0.000000e+00 : f32
    %184 = vector.broadcast %cst_66 : f32 to vector<2x64xf32>
    %185 = arith.maximumf %183, %184 : vector<2x64xf32>
    %c0_67 = arith.constant 0 : index
    %c0_68 = arith.constant 0 : index
    %186 = vector.load %arg15[%c0_67, %c0_68] : memref<64x128xf32, #tpu.memory_space<vmem>>, vector<64x128xf32>
    %cst_69 = arith.constant dense<0.000000e+00> : vector<2x128xf32>
    %187 = tpu.matmul %185, %186, %cst_69 {dimension_numbers = #tpu.dot_dimension_numbers<[1], [0], [0], [1], [0, 0, 1, 1], [], []>} : vector<2x64xf32>, vector<64x128xf32>, vector<2x128xf32> -> vector<2x128xf32>
    %c0_70 = arith.constant 0 : index
    %c0_71 = arith.constant 0 : index
    %188 = vector.load %arg16[%c0_70, %c0_71] : memref<1x128xf32, #tpu.memory_space<vmem>>, vector<1x128xf32>
    %189 = vector.broadcast %188 : vector<1x128xf32> to vector<2x128xf32>
    %190 = arith.addf %187, %189 : vector<2x128xf32>
    %c0_72 = arith.constant 0 : index
    %c0_73 = arith.constant 0 : index
    %191 = vector.load %arg17[%c0_72, %c0_73] : memref<2x128xf32, #tpu.memory_space<vmem>>, vector<2x128xf32>
    tpu.vector_store %arg17[%c0_72, %c0_73], %190 {strides = array<i32>} : memref<2x128xf32, #tpu.memory_space<vmem>>, vector<2x128xf32>,
    return
  }
}

</mosaic_0001>

<llo_original>
// kernel: gnn_forward.1
$region0: #{gnn_forward.1}
  #allocation0 [shape = 'u32[]', space=smem, size = 0x4, offset = 0x4, fixed_abs, tag = 'smem constant byte address 0x4 - core index']
  #allocation1 [shape = 'u32[144,128]{1,0:T(1,128)}', space=vmem, size = 0x12000, scoped, tag = 'internal scratch']
  %s0 = inlined_call_operand.vmem [shape: f32[16,8], index: 0, kind: input, shape index: {}]
  %s1 = inlined_call_operand.vmem [shape: f32[16,16], index: 1, kind: input, shape index: {}]
  %s2 = inlined_call_operand.vmem [shape: f32[2,16], index: 2, kind: input, shape index: {}]
  %s3 = inlined_call_operand.vmem [shape: f32[8,136], index: 3, kind: input, shape index: {}]
  %s4 = inlined_call_operand.vmem [shape: f32[1,128], index: 4, kind: input, shape index: {}]
  %s5 = inlined_call_operand.vmem [shape: f32[1,128], index: 5, kind: input, shape index: {}]
  %s6 = inlined_call_operand.vmem [shape: f32[128,136], index: 6, kind: input, shape index: {}]
  %s7 = inlined_call_operand.vmem [shape: f32[1,128], index: 7, kind: input, shape index: {}]
  %s8 = inlined_call_operand.vmem [shape: f32[1,128], index: 8, kind: input, shape index: {}]
  %s9 = inlined_call_operand.vmem [shape: f32[128,136], index: 9, kind: input, shape index: {}]
  %s10 = inlined_call_operand.vmem [shape: f32[1,32], index: 10, kind: input, shape index: {}]
  %s11 = inlined_call_operand.vmem [shape: f32[32,256], index: 11, kind: input, shape index: {}]
  %s12 = inlined_call_operand.vmem [shape: f32[1,256], index: 12, kind: input, shape index: {}]
  %s13 = inlined_call_operand.vmem [shape: f32[256,64], index: 13, kind: input, shape index: {}]
  %s14 = inlined_call_operand.vmem [shape: f32[1,64], index: 14, kind: input, shape index: {}]
  %s15 = inlined_call_operand.vmem [shape: f32[64,128], index: 15, kind: input, shape index: {}]
  %s16 = inlined_call_operand.vmem [shape: f32[1,128], index: 16, kind: input, shape index: {}]
  %s17 = inlined_call_operand.vmem [shape: f32[2,128], index: 17, kind: output, shape index: {}]
  %s18 = sld [smem:[#allocation0]]
  $region78: #{gnn_forward.1} parent=0
    _
  %s20 = ssub.s32 1, %s18
  %s21 = scalar_select 0, %s20, %s18
  // Predicated region
  $region2: #{gnn_forward.1} parent=0 // pred_check
    _
  $region3: #{gnn_forward.1} parent=0 // pred_check_branch
    %23 = sbr.rel (0) target = $region5
  $region4: #{gnn_forward.1} parent=0 // pred_region
    _
  $region5: #{gnn_forward.1} parent=0 // pred_fallthru
    _
  // Predicated region
  $region6: #{gnn_forward.1} parent=0 // pred_check
    _
  $region7: #{gnn_forward.1} parent=0 // pred_check_branch
    %25 = sbr.rel (0) target = $region9
  $region8: #{gnn_forward.1} parent=0 // pred_region
    _
  $region9: #{gnn_forward.1} parent=0 // pred_fallthru
    _
  // Predicated region
  $region10: #{gnn_forward.1} parent=0 // pred_check
    _
  $region11: #{gnn_forward.1} parent=0 // pred_check_branch
    %27 = sbr.rel (0) target = $region13
  $region12: #{gnn_forward.1} parent=0 // pred_region
    _
  $region13: #{gnn_forward.1} parent=0 // pred_fallthru
    _
  // Predicated region
  $region14: #{gnn_forward.1} parent=0 // pred_check
    _
  $region15: #{gnn_forward.1} parent=0 // pred_check_branch
    %29 = sbr.rel (0) target = $region17
  $region16: #{gnn_forward.1} parent=0 // pred_region
    _
  $region17: #{gnn_forward.1} parent=0 // pred_fallthru
    _
  // Predicated region
  $region18: #{gnn_forward.1} parent=0 // pred_check
    _
  $region19: #{gnn_forward.1} parent=0 // pred_check_branch
    %31 = sbr.rel (0) target = $region21
  $region20: #{gnn_forward.1} parent=0 // pred_region
    _
  $region21: #{gnn_forward.1} parent=0 // pred_fallthru
    _
  // Predicated region
  $region22: #{gnn_forward.1} parent=0 // pred_check
    _
  $region23: #{gnn_forward.1} parent=0 // pred_check_branch
    %33 = sbr.rel (0) target = $region25
  $region24: #{gnn_forward.1} parent=0 // pred_region
    _
  $region25: #{gnn_forward.1} parent=0 // pred_fallthru
    _
  // Predicated region
  $region26: #{gnn_forward.1} parent=0 // pred_check
    _
  $region27: #{gnn_forward.1} parent=0 // pred_check_branch
    %35 = sbr.rel (0) target = $region29
  $region28: #{gnn_forward.1} parent=0 // pred_region
    _
  $region29: #{gnn_forward.1} parent=0 // pred_fallthru
    _
  // Predicated region
  $region30: #{gnn_forward.1} parent=0 // pred_check
    _
  $region31: #{gnn_forward.1} parent=0 // pred_check_branch
    %37 = sbr.rel (0) target = $region33
  $region32: #{gnn_forward.1} parent=0 // pred_region
    _
  $region33: #{gnn_forward.1} parent=0 // pred_fallthru
    _
  // Predicated region
  $region34: #{gnn_forward.1} parent=0 // pred_check
    _
  $region35: #{gnn_forward.1} parent=0 // pred_check_branch
    %39 = sbr.rel (0) target = $region37
  $region36: #{gnn_forward.1} parent=0 // pred_region
    _
  $region37: #{gnn_forward.1} parent=0 // pred_fallthru
    _
  // Predicated region
  $region38: #{gnn_forward.1} parent=0 // pred_check
    _
  $region39: #{gnn_forward.1} parent=0 // pred_check_branch
    %41 = sbr.rel (0) target = $region41
  $region40: #{gnn_forward.1} parent=0 // pred_region
    _
  $region41: #{gnn_forward.1} parent=0 // pred_fallthru
    _
  // Predicated region
  $region42: #{gnn_forward.1} parent=0 // pred_check
    _
  $region43: #{gnn_forward.1} parent=0 // pred_check_branch
    %43 = sbr.rel (0) target = $region45
  $region44: #{gnn_forward.1} parent=0 // pred_region
    _
  $region45: #{gnn_forward.1} parent=0 // pred_fallthru
    _
  // Predicated region
  $region46: #{gnn_forward.1} parent=0 // pred_check
    _
  $region47: #{gnn_forward.1} parent=0 // pred_check_branch
    %45 = sbr.rel (0) target = $region49
  $region48: #{gnn_forward.1} parent=0 // pred_region
    _
  $region49: #{gnn_forward.1} parent=0 // pred_fallthru
    _
  // Predicated region
  $region50: #{gnn_forward.1} parent=0 // pred_check
    _
  $region51: #{gnn_forward.1} parent=0 // pred_check_branch
    %47 = sbr.rel (0) target = $region53
  $region52: #{gnn_forward.1} parent=0 // pred_region
    _
  $region53: #{gnn_forward.1} parent=0 // pred_fallthru
    _
  // Predicated region
  $region54: #{gnn_forward.1} parent=0 // pred_check
    _
  $region55: #{gnn_forward.1} parent=0 // pred_check_branch
    %49 = sbr.rel (0) target = $region57
  $region56: #{gnn_forward.1} parent=0 // pred_region
    _
  $region57: #{gnn_forward.1} parent=0 // pred_fallthru
    _
  // Predicated region
  $region58: #{gnn_forward.1} parent=0 // pred_check
    _
  $region59: #{gnn_forward.1} parent=0 // pred_check_branch
    %51 = sbr.rel (0) target = $region61
  $region60: #{gnn_forward.1} parent=0 // pred_region
    _
  $region61: #{gnn_forward.1} parent=0 // pred_fallthru
    _
  // Predicated region
  $region62: #{gnn_forward.1} parent=0 // pred_check
    _
  $region63: #{gnn_forward.1} parent=0 // pred_check_branch
    %53 = sbr.rel (0) target = $region65
  $region64: #{gnn_forward.1} parent=0 // pred_region
    _
  $region65: #{gnn_forward.1} parent=0 // pred_fallthru
    _
  // Predicated region
  $region66: #{gnn_forward.1} parent=0 // pred_check
    _
  $region67: #{gnn_forward.1} parent=0 // pred_check_branch
    %55 = sbr.rel (0) target = $region69
  $region68: #{gnn_forward.1} parent=0 // pred_region
    _
  $region69: #{gnn_forward.1} parent=0 // pred_fallthru
    _
  %v56 = vld [vmem:[%s1] sm:$0xff]
  %v57 = vld [vmem:[%s1 + $0x8] sm:$0xff]
  %vm58 = vcmp.gt.f32.partialorder %v56, 0.0
  %vm59 = vcmp.gt.f32.partialorder %v57, 0.0
  %v60 = vsel %vm58, 0.0, -1e+30
  %v61 = vsel %vm59, 0.0, -1e+30
  %v62 = vld [vmem:[%s0] sm:$0xff]
  %v63 = vld [vmem:[%s0 + $0x8] sm:$0xff]
  %v64 = vld [vmem:[%s3] sm:$0xff]
  %v65 = vld [vmem:[%s3 + $0x8] sm:$0xff]
  %vm66 = vcmask 64512
  %v68 = vsel %vm66, %v62, 0
  %v71 = vsel %vm66, %v63, 0
  %73 = vmatprep.subr.mxu0 0.0
  %74 = vmatpush1.msra.mxu0 0.0
  %75 = vmatprep.subr.mxu0 0.0
  %76 = vmatpush1.msra.mxu0 0.0
  %77 = vmatprep.subr.mxu0 0.0
  %78 = vmatpush1.msra.mxu0 0.0
  %79 = vmatprep.subr.mxu0 0.0
  %80 = vmatpush1.msra.mxu0 0.0
  %81 = vmatprep.subr.mxu0 0.0
  %82 = vmatpush1.msra.mxu0 0.0
  %83 = vmatprep.subr.mxu0 0.0
  %84 = vmatpush1.msra.mxu0 0.0
  %85 = vmatprep.subr.mxu0 0.0
  %86 = vmatpush1.msra.mxu0 0.0
  %87 = vmatprep.subr.mxu0 0.0
  %88 = vmatpush1.msra.mxu0 0.0
  %89 = vmatprep.subr.mxu0 0.0
  %90 = vmatpush1.msra.mxu0 0.0
  %91 = vmatprep.subr.mxu0 0.0
  %92 = vmatpush1.msra.mxu0 0.0
  %93 = vmatprep.subr.mxu0 0.0
  %94 = vmatpush1.msra.mxu0 0.0
  %95 = vmatprep.subr.mxu0 0.0
  %96 = vmatpush1.msra.mxu0 0.0
  %97 = vmatprep.subr.mxu0 0.0
  %98 = vmatpush1.msra.mxu0 0.0
  %99 = vmatprep.subr.mxu0 0.0
  %100 = vmatpush1.msra.mxu0 0.0
  %101 = vmatprep.subr.mxu0 0.0
  %102 = vmatpush1.msra.mxu0 0.0
  %103 = vmatprep.subr.mxu0 %v65
  %104 = vmatpush1.msra.mxu0 %v64
  %105 = vmatprep.subr.mxu0 0.0
  %106 = vmatpush2.msra.mxu0 0.0
  %107 = vmatprep.subr.mxu0 0.0
  %108 = vmatpush2.msra.mxu0 0.0
  %109 = vmatprep.subr.mxu0 0.0
  %110 = vmatpush2.msra.mxu0 0.0
  %111 = vmatprep.subr.mxu0 0.0
  %112 = vmatpush2.msra.mxu0 0.0
  %113 = vmatprep.subr.mxu0 0.0
  %114 = vmatpush2.msra.mxu0 0.0
  %115 = vmatprep.subr.mxu0 0.0
  %116 = vmatpush2.msra.mxu0 0.0
  %117 = vmatprep.subr.mxu0 0.0
  %118 = vmatpush2.msra.mxu0 0.0
  %119 = vmatprep.subr.mxu0 0.0
  %120 = vmatpush2.msra.mxu0 0.0
  %121 = vmatprep.subr.mxu0 0.0
  %122 = vmatpush2.msra.mxu0 0.0
  %123 = vmatprep.subr.mxu0 0.0
  %124 = vmatpush2.msra.mxu0 0.0
  %125 = vmatprep.subr.mxu0 0.0
  %126 = vmatpush2.msra.mxu0 0.0
  %127 = vmatprep.subr.mxu0 0.0
  %128 = vmatpush2.msra.mxu0 0.0
  %129 = vmatprep.subr.mxu0 0.0
  %130 = vmatpush2.msra.mxu0 0.0
  %131 = vmatprep.subr.mxu0 0.0
  %132 = vmatpush2.msra.mxu0 0.0
  %133 = vmatprep.subr.mxu0 0.0
  %134 = vmatpush2.msra.mxu0 0.0
  %135 = vmatprep.subr.mxu0 0.0
  %136 = vmatpush2.msra.mxu0 0.0
  %137 = vmatprep.mubr.f32.mxu0 0.0
  %138 = vmatmul.mubr.f32.gmra.mxu0 %v68
  %v139 = vpop.f32.mrf.mxu0
  %v140 = vadd.f32 0.0, %v139
  %v141 = vpop.f32.mrf.mxu0
  %v142 = vadd.f32 0.0, %v141
  %143 = vmatprep.mubr.f32.mxu0 0.0
  %144 = vmatmul.mubr.f32.gmra.mxu0 %v71
  %v145 = vpop.f32.mrf.mxu0
  %v146 = vadd.f32 0.0, %v145
  %v147 = vpop.f32.mrf.mxu0
  %v148 = vadd.f32 0.0, %v147
  %149 = vdwg.mxu0
  %150 = vxpose.xlu0.b32.start [1/16] %v142, 128
  %151 = vxpose.xlu0.b32.cont [2/16] %v148, 128
  %152 = vxpose.xlu0.b32.cont [3/16] 0.0, 128
  %153 = vxpose.xlu0.b32.cont [4/16] 0.0, 128
  %154 = vxpose.xlu0.b32.cont [5/16] 0.0, 128
  %155 = vxpose.xlu0.b32.cont [6/16] 0.0, 128
  %156 = vxpose.xlu0.b32.cont [7/16] 0.0, 128
  %157 = vxpose.xlu0.b32.cont [8/16] 0.0, 128
  %158 = vxpose.xlu0.b32.cont [9/16] 0.0, 128
  %159 = vxpose.xlu0.b32.cont [10/16] 0.0, 128
  %160 = vxpose.xlu0.b32.cont [11/16] 0.0, 128
  %161 = vxpose.xlu0.b32.cont [12/16] 0.0, 128
  %162 = vxpose.xlu0.b32.cont [13/16] 0.0, 128
  %163 = vxpose.xlu0.b32.cont [14/16] 0.0, 128
  %164 = vxpose.xlu0.b32.cont [15/16] 0.0, 128
  %165 = vxpose.xlu0.b32.end [16/16] 0.0, 128
  %v166 = vpop.trf.xlu0
  %v167 = vpop.trf.xlu0
  %v168 = vpop.trf.xlu0
  %v169 = vpop.trf.xlu0
  %v170 = vpop.trf.xlu0
  %v171 = vpop.trf.xlu0
  %v172 = vpop.trf.xlu0
  %v173 = vpop.trf.xlu0
  %v174 = vpop.trf.xlu0
  %v175 = vpop.trf.xlu0
  %v176 = vpop.trf.xlu0
  %v177 = vpop.trf.xlu0
  %v178 = vpop.trf.xlu0
  %v179 = vpop.trf.xlu0
  %v180 = vpop.trf.xlu0
  %v181 = vpop.trf.xlu0
  %184 = vrot.lane.b32.xlu0 %v142, 124
  %v185 = vpop.permute.xlu0 %184
  %186 = vrot.lane.b32.xlu0 %v148, 124
  %v187 = vpop.permute.xlu0 %186
  %190 = vxpose.xlu0.b32.start [1/16] %v185, 128
  %191 = vxpose.xlu0.b32.cont [2/16] %v187, 128
  %192 = vxpose.xlu0.b32.cont [3/16] 0.0, 128
  %193 = vxpose.xlu0.b32.cont [4/16] 0.0, 128
  %194 = vxpose.xlu0.b32.cont [5/16] 0.0, 128
  %195 = vxpose.xlu0.b32.cont [6/16] 0.0, 128
  %196 = vxpose.xlu0.b32.cont [7/16] 0.0, 128
  %197 = vxpose.xlu0.b32.cont [8/16] 0.0, 128
  %198 = vxpose.xlu0.b32.cont [9/16] 0.0, 128
  %199 = vxpose.xlu0.b32.cont [10/16] 0.0, 128
  %200 = vxpose.xlu0.b32.cont [11/16] 0.0, 128
  %201 = vxpose.xlu0.b32.cont [12/16] 0.0, 128
  %202 = vxpose.xlu0.b32.cont [13/16] 0.0, 128
  %203 = vxpose.xlu0.b32.cont [14/16] 0.0, 128
  %204 = vxpose.xlu0.b32.cont [15/16] 0.0, 128
  %205 = vxpose.xlu0.b32.end [16/16] 0.0, 128
  %v206 = vpop.trf.xlu0
  %v207 = vpop.trf.xlu0
  %v208 = vpop.trf.xlu0
  %v209 = vpop.trf.xlu0
  %v210 = vpop.trf.xlu0
  %v211 = vpop.trf.xlu0
  %v212 = vpop.trf.xlu0
  %v213 = vpop.trf.xlu0
  %v214 = vpop.trf.xlu0
  %v215 = vpop.trf.xlu0
  %v216 = vpop.trf.xlu0
  %v217 = vpop.trf.xlu0
  %v218 = vpop.trf.xlu0
  %v219 = vpop.trf.xlu0
  %v220 = vpop.trf.xlu0
  %v221 = vpop.trf.xlu0
  %v222 = vlaneseq
  %v223 = vshrl.u32 %v222, 7
  %v224 = vsub.s32 0, %v223
  %v225 = vrot.slane %v206, %v224
  %227 = vbcast.lane.b32.xlu0 %v225, 256
  %v228 = vpop.permute.xlu0 %227
  %s230 = sor.u32 256, 8
  %231 = vbcast.lane.b32.xlu0 %v225, %s230
  %v232 = vpop.permute.xlu0 %231
  %v233 = vlaneseq
  %v234 = vshrl.u32 %v233, 7
  %v235 = vsub.s32 1, %v234
  %v236 = vrot.slane %v206, %v235
  %238 = vbcast.lane.b32.xlu0 %v236, 256
  %v239 = vpop.permute.xlu0 %238
  %s241 = sor.u32 256, 8
  %242 = vbcast.lane.b32.xlu0 %v236, %s241
  %v243 = vpop.permute.xlu0 %242
  %v244 = vlaneseq
  %v245 = vshrl.u32 %v244, 7
  %v246 = vsub.s32 2, %v245
  %v247 = vrot.slane %v206, %v246
  %249 = vbcast.lane.b32.xlu0 %v247, 256
  %v250 = vpop.permute.xlu0 %249
  %s252 = sor.u32 256, 8
  %253 = vbcast.lane.b32.xlu0 %v247, %s252
  %v254 = vpop.permute.xlu0 %253
  %v255 = vlaneseq
  %v256 = vshrl.u32 %v255, 7
  %v257 = vsub.s32 3, %v256
  %v258 = vrot.slane %v206, %v257
  %260 = vbcast.lane.b32.xlu0 %v258, 256
  %v261 = vpop.permute.xlu0 %260
  %s263 = sor.u32 256, 8
  %264 = vbcast.lane.b32.xlu0 %v258, %s263
  %v265 = vpop.permute.xlu0 %264
  %v268 = vunpack.c.l.s4 1966171168
  %v269 = vunpack.c.0.s8 %v268
  %v270 = vlaneseq
  %v271 = vshrl.u32 %v270, 7
  %v272 = vsub.s32 %v269, %v271
  %v273 = vrot.slane %v166, %v272
  %v274 = vcombine.high %v273, %v273
  %v276 = vunpack.c.l.s4 1966171168
  %v277 = vunpack.c.0.s8 %v276
  %v278 = vlaneseq
  %v279 = vshrl.u32 %v278, 7
  %v280 = vsub.s32 %v277, %v279
  %v281 = vrot.slane %v273, %v280
  %v283 = vunpack.c.l.s4 1966171168
  %v284 = vunpack.c.0.s8 %v283
  %v285 = vlaneseq
  %v286 = vshrl.u32 %v285, 7
  %v287 = vsub.s32 %v284, %v286
  %v288 = vrot.slane %v274, %v287
  %v289 = vcombine.high %v281, %v281
  %v290 = vcombine.high %v288, %v288
  %v291 = vlaneseq
  %v292 = vshrl.u32 %v291, 7
  %v293 = vsub.s32 0, %v292
  %v294 = vrot.slane %v281, %v293
  %v295 = vlaneseq
  %v296 = vshrl.u32 %v295, 7
  %v297 = vsub.s32 0, %v296
  %v298 = vrot.slane %v288, %v297
  %v299 = vlaneseq
  %v300 = vshrl.u32 %v299, 7
  %v301 = vsub.s32 0, %v300
  %v302 = vrot.slane %v289, %v301
  %v303 = vlaneseq
  %v304 = vshrl.u32 %v303, 7
  %v305 = vsub.s32 0, %v304
  %v306 = vrot.slane %v290, %v305
  %v311 = vadd.f32 %v228, %v294
  %v312 = vadd.f32 %v232, %v294
  %v313 = vadd.f32 %v239, %v298
  %v314 = vadd.f32 %v243, %v298
  %v315 = vadd.f32 %v250, %v302
  %v316 = vadd.f32 %v254, %v302
  %v317 = vadd.f32 %v261, %v306
  %v318 = vadd.f32 %v265, %v306
  %vm319 = vcmp.gt.f32.partialorder %v311, 0.0
  %vm320 = vcmp.gt.f32.partialorder %v312, 0.0
  %vm321 = vcmp.gt.f32.partialorder %v313, 0.0
  %vm322 = vcmp.gt.f32.partialorder %v314, 0.0
  %vm323 = vcmp.gt.f32.partialorder %v315, 0.0
  %vm324 = vcmp.gt.f32.partialorder %v316, 0.0
  %vm325 = vcmp.gt.f32.partialorder %v317, 0.0
  %vm326 = vcmp.gt.f32.partialorder %v318, 0.0
  %v327 = vmul.f32 %v311, 0.2
  %v328 = vmul.f32 %v312, 0.2
  %v329 = vmul.f32 %v313, 0.2
  %v330 = vmul.f32 %v314, 0.2
  %v331 = vmul.f32 %v315, 0.2
  %v332 = vmul.f32 %v316, 0.2
  %v333 = vmul.f32 %v317, 0.2
  %v334 = vmul.f32 %v318, 0.2
  %v335 = vsel %vm319, %v311, %v327
  %v336 = vsel %vm320, %v312, %v328
  %v337 = vsel %vm321, %v313, %v329
  %v338 = vsel %vm322, %v314, %v330
  %v339 = vsel %vm323, %v315, %v331
  %v340 = vsel %vm324, %v316, %v332
  %v341 = vsel %vm325, %v317, %v333
  %v342 = vsel %vm326, %v318, %v334
  %v343 = vadd.f32 %v335, %v60
  %v344 = vadd.f32 %v336, %v61
  %v345 = vadd.f32 %v337, %v60
  %v346 = vadd.f32 %v338, %v61
  %v347 = vadd.f32 %v339, %v60
  %v348 = vadd.f32 %v340, %v61
  %v349 = vadd.f32 %v341, %v60
  %v350 = vadd.f32 %v342, %v61
  %vm351 = vcmask 130048
  %v352 = vsel %vm351, %v343, -inf
  %353 = vmax.xlane.f32.xlu0 %v352
  %v354 = vpop.xlane.xlu0 %353
  %v355 = vsel %vm351, %v344, -inf
  %356 = vmax.xlane.f32.xlu0 %v355
  %v357 = vpop.xlane.xlu0 %356
  %v358 = vsel %vm351, %v345, -inf
  %359 = vmax.xlane.f32.xlu0 %v358
  %v360 = vpop.xlane.xlu0 %359
  %v361 = vsel %vm351, %v346, -inf
  %362 = vmax.xlane.f32.xlu0 %v361
  %v363 = vpop.xlane.xlu0 %362
  %v364 = vsel %vm351, %v347, -inf
  %365 = vmax.xlane.f32.xlu0 %v364
  %v366 = vpop.xlane.xlu0 %365
  %v367 = vsel %vm351, %v348, -inf
  %368 = vmax.xlane.f32.xlu0 %v367
  %v369 = vpop.xlane.xlu0 %368
  %v370 = vsel %vm351, %v349, -inf
  %371 = vmax.xlane.f32.xlu0 %v370
  %v372 = vpop.xlane.xlu0 %371
  %v373 = vsel %vm351, %v350, -inf
  %374 = vmax.xlane.f32.xlu0 %v373
  %v375 = vpop.xlane.xlu0 %374
  %v376 = vsub.f32 %v343, %v354
  %v377 = vsub.f32 %v344, %v357
  %v378 = vsub.f32 %v345, %v360
  %v379 = vsub.f32 %v346, %v363
  %v380 = vsub.f32 %v347, %v366
  %v381 = vsub.f32 %v348, %v369
  %v382 = vsub.f32 %v349, %v372
  %v383 = vsub.f32 %v350, %v375
  %v384 = vmul.f32 %v376, 1.442695
  %v385 = vpow.pop %v384
  %v386 = vmul.f32 %v377, 1.442695
  %v387 = vpow.pop %v386
  %v388 = vmul.f32 %v378, 1.442695
  %v389 = vpow.pop %v388
  %v390 = vmul.f32 %v379, 1.442695
  %v391 = vpow.pop %v390
  %v392 = vmul.f32 %v380, 1.442695
  %v393 = vpow.pop %v392
  %v394 = vmul.f32 %v381, 1.442695
  %v395 = vpow.pop %v394
  %v396 = vmul.f32 %v382, 1.442695
  %v397 = vpow.pop %v396
  %v398 = vmul.f32 %v383, 1.442695
  %v399 = vpow.pop %v398
  %v400 = vsel %vm351, %v385, 0.0
  %401 = vadd.xlane.f32.xlu0 %v400
  %v402 = vpop.xlane.xlu0 %401
  %v403 = vsel %vm351, %v387, 0.0
  %404 = vadd.xlane.f32.xlu0 %v403
  %v405 = vpop.xlane.xlu0 %404
  %v406 = vsel %vm351, %v389, 0.0
  %407 = vadd.xlane.f32.xlu0 %v406
  %v408 = vpop.xlane.xlu0 %407
  %v409 = vsel %vm351, %v391, 0.0
  %410 = vadd.xlane.f32.xlu0 %v409
  %v411 = vpop.xlane.xlu0 %410
  %v412 = vsel %vm351, %v393, 0.0
  %413 = vadd.xlane.f32.xlu0 %v412
  %v414 = vpop.xlane.xlu0 %413
  %v415 = vsel %vm351, %v395, 0.0
  %416 = vadd.xlane.f32.xlu0 %v415
  %v417 = vpop.xlane.xlu0 %416
  %v418 = vsel %vm351, %v397, 0.0
  %419 = vadd.xlane.f32.xlu0 %v418
  %v420 = vpop.xlane.xlu0 %419
  %v421 = vsel %vm351, %v399, 0.0
  %422 = vadd.xlane.f32.xlu0 %v421
  %v423 = vpop.xlane.xlu0 %422
  %v424 = vrcp.pop %v402
  %v425 = vrcp.pop %v405
  %v426 = vrcp.pop %v408
  %v427 = vrcp.pop %v411
  %v428 = vrcp.pop %v414
  %v429 = vrcp.pop %v417
  %v430 = vrcp.pop %v420
  %v431 = vrcp.pop %v423
  %v432 = vmul.f32 %v385, %v424
  %v433 = vmul.f32 %v387, %v425
  %v434 = vmul.f32 %v389, %v426
  %v435 = vmul.f32 %v391, %v427
  %v436 = vmul.f32 %v393, %v428
  %v437 = vmul.f32 %v395, %v429
  %v438 = vmul.f32 %v397, %v430
  %v439 = vmul.f32 %v399, %v431
  %v441 = vsel %vm351, %v432, 0
  %v444 = vsel %vm351, %v433, 0
  %446 = vmatprep.subr.mxu0 0.0
  %447 = vmatpush1.msra.mxu0 0.0
  %448 = vmatprep.subr.mxu0 0.0
  %449 = vmatpush1.msra.mxu0 0.0
  %450 = vmatprep.subr.mxu0 0.0
  %451 = vmatpush1.msra.mxu0 0.0
  %452 = vmatprep.subr.mxu0 0.0
  %453 = vmatpush1.msra.mxu0 0.0
  %454 = vmatprep.subr.mxu0 0.0
  %455 = vmatpush1.msra.mxu0 0.0
  %456 = vmatprep.subr.mxu0 0.0
  %457 = vmatpush1.msra.mxu0 0.0
  %458 = vmatprep.subr.mxu0 0.0
  %459 = vmatpush1.msra.mxu0 0.0
  %460 = vmatprep.subr.mxu0 0.0
  %461 = vmatpush1.msra.mxu0 0.0
  %462 = vmatprep.subr.mxu0 0.0
  %463 = vmatpush1.msra.mxu0 0.0
  %464 = vmatprep.subr.mxu0 0.0
  %465 = vmatpush1.msra.mxu0 0.0
  %466 = vmatprep.subr.mxu0 0.0
  %467 = vmatpush1.msra.mxu0 0.0
  %468 = vmatprep.subr.mxu0 0.0
  %469 = vmatpush1.msra.mxu0 0.0
  %470 = vmatprep.subr.mxu0 0.0
  %471 = vmatpush1.msra.mxu0 0.0
  %472 = vmatprep.subr.mxu0 0.0
  %473 = vmatpush1.msra.mxu0 0.0
  %474 = vmatprep.subr.mxu0 0.0
  %475 = vmatpush1.msra.mxu0 %v146
  %476 = vmatprep.subr.mxu0 0.0
  %477 = vmatpush1.msra.mxu0 %v140
  %478 = vmatprep.subr.mxu0 0.0
  %479 = vmatpush2.msra.mxu0 0.0
  %480 = vmatprep.subr.mxu0 0.0
  %481 = vmatpush2.msra.mxu0 0.0
  %482 = vmatprep.subr.mxu0 0.0
  %483 = vmatpush2.msra.mxu0 0.0
  %484 = vmatprep.subr.mxu0 0.0
  %485 = vmatpush2.msra.mxu0 0.0
  %486 = vmatprep.subr.mxu0 0.0
  %487 = vmatpush2.msra.mxu0 0.0
  %488 = vmatprep.subr.mxu0 0.0
  %489 = vmatpush2.msra.mxu0 0.0
  %490 = vmatprep.subr.mxu0 0.0
  %491 = vmatpush2.msra.mxu0 0.0
  %492 = vmatprep.subr.mxu0 0.0
  %493 = vmatpush2.msra.mxu0 0.0
  %494 = vmatprep.subr.mxu0 0.0
  %495 = vmatpush2.msra.mxu0 0.0
  %496 = vmatprep.subr.mxu0 0.0
  %497 = vmatpush2.msra.mxu0 0.0
  %498 = vmatprep.subr.mxu0 0.0
  %499 = vmatpush2.msra.mxu0 0.0
  %500 = vmatprep.subr.mxu0 0.0
  %501 = vmatpush2.msra.mxu0 0.0
  %502 = vmatprep.subr.mxu0 0.0
  %503 = vmatpush2.msra.mxu0 0.0
  %504 = vmatprep.subr.mxu0 0.0
  %505 = vmatpush2.msra.mxu0 0.0
  %506 = vmatprep.subr.mxu0 0.0
  %507 = vmatpush2.msra.mxu0 0.0
  %508 = vmatprep.subr.mxu0 0.0
  %509 = vmatpush2.msra.mxu0 0.0
  %510 = vmatprep.mubr.f32.mxu0 0.0
  %511 = vmatmul.mubr.f32.gmra.mxu0 %v441
  %v512 = vpop.f32.mrf.mxu0
  %v513 = vadd.f32 0.0, %v512
  %v514 = vpop.f32.mrf.mxu0
  %515 = vmatprep.mubr.f32.mxu0 0.0
  %516 = vmatmul.mubr.f32.gmra.mxu0 %v444
  %v517 = vpop.f32.mrf.mxu0
  %v518 = vadd.f32 0.0, %v517
  %v519 = vpop.f32.mrf.mxu0
  %520 = vdwg.mxu0
  %523 = vrot.lane.b32.xlu0 %v140, 96
  %v524 = vpop.permute.xlu0 %523
  %525 = vrot.lane.b32.xlu0 %v146, 96
  %v526 = vpop.permute.xlu0 %525
  %v530 = vsel %vm351, %v434, 0
  %v533 = vsel %vm351, %v435, 0
  %535 = vmatprep.subr.mxu0 0.0
  %536 = vmatpush1.msra.mxu0 0.0
  %537 = vmatprep.subr.mxu0 0.0
  %538 = vmatpush1.msra.mxu0 0.0
  %539 = vmatprep.subr.mxu0 0.0
  %540 = vmatpush1.msra.mxu0 0.0
  %541 = vmatprep.subr.mxu0 0.0
  %542 = vmatpush1.msra.mxu0 0.0
  %543 = vmatprep.subr.mxu0 0.0
  %544 = vmatpush1.msra.mxu0 0.0
  %545 = vmatprep.subr.mxu0 0.0
  %546 = vmatpush1.msra.mxu0 0.0
  %547 = vmatprep.subr.mxu0 0.0
  %548 = vmatpush1.msra.mxu0 0.0
  %549 = vmatprep.subr.mxu0 0.0
  %550 = vmatpush1.msra.mxu0 0.0
  %551 = vmatprep.subr.mxu0 0.0
  %552 = vmatpush1.msra.mxu0 0.0
  %553 = vmatprep.subr.mxu0 0.0
  %554 = vmatpush1.msra.mxu0 0.0
  %555 = vmatprep.subr.mxu0 0.0
  %556 = vmatpush1.msra.mxu0 0.0
  %557 = vmatprep.subr.mxu0 0.0
  %558 = vmatpush1.msra.mxu0 0.0
  %559 = vmatprep.subr.mxu0 0.0
  %560 = vmatpush1.msra.mxu0 0.0
  %561 = vmatprep.subr.mxu0 0.0
  %562 = vmatpush1.msra.mxu0 0.0
  %563 = vmatprep.subr.mxu0 0.0
  %564 = vmatpush1.msra.mxu0 %v526
  %565 = vmatprep.subr.mxu0 0.0
  %566 = vmatpush1.msra.mxu0 %v524
  %567 = vmatprep.subr.mxu0 0.0
  %568 = vmatpush2.msra.mxu0 0.0
  %569 = vmatprep.subr.mxu0 0.0
  %570 = vmatpush2.msra.mxu0 0.0
  %571 = vmatprep.subr.mxu0 0.0
  %572 = vmatpush2.msra.mxu0 0.0
  %573 = vmatprep.subr.mxu0 0.0
  %574 = vmatpush2.msra.mxu0 0.0
  %575 = vmatprep.subr.mxu0 0.0
  %576 = vmatpush2.msra.mxu0 0.0
  %577 = vmatprep.subr.mxu0 0.0
  %578 = vmatpush2.msra.mxu0 0.0
  %579 = vmatprep.subr.mxu0 0.0
  %580 = vmatpush2.msra.mxu0 0.0
  %581 = vmatprep.subr.mxu0 0.0
  %582 = vmatpush2.msra.mxu0 0.0
  %583 = vmatprep.subr.mxu0 0.0
  %584 = vmatpush2.msra.mxu0 0.0
  %585 = vmatprep.subr.mxu0 0.0
  %586 = vmatpush2.msra.mxu0 0.0
  %587 = vmatprep.subr.mxu0 0.0
  %588 = vmatpush2.msra.mxu0 0.0
  %589 = vmatprep.subr.mxu0 0.0
  %590 = vmatpush2.msra.mxu0 0.0
  %591 = vmatprep.subr.mxu0 0.0
  %592 = vmatpush2.msra.mxu0 0.0
  %593 = vmatprep.subr.mxu0 0.0
  %594 = vmatpush2.msra.mxu0 0.0
  %595 = vmatprep.subr.mxu0 0.0
  %596 = vmatpush2.msra.mxu0 0.0
  %597 = vmatprep.subr.mxu0 0.0
  %598 = vmatpush2.msra.mxu0 0.0
  %599 = vmatprep.mubr.f32.mxu0 0.0
  %600 = vmatmul.mubr.f32.gmra.mxu0 %v530
  %v601 = vpop.f32.mrf.mxu0
  %v602 = vadd.f32 0.0, %v601
  %v603 = vpop.f32.mrf.mxu0
  %604 = vmatprep.mubr.f32.mxu0 0.0
  %605 = vmatmul.mubr.f32.gmra.mxu0 %v533
  %v606 = vpop.f32.mrf.mxu0
  %v607 = vadd.f32 0.0, %v606
  %v608 = vpop.f32.mrf.mxu0
  %609 = vdwg.mxu0
  %610 = vrot.lane.b32.xlu0 %v140, 64
  %v611 = vpop.permute.xlu0 %610
  %612 = vrot.lane.b32.xlu0 %v146, 64
  %v613 = vpop.permute.xlu0 %612
  %v617 = vsel %vm351, %v436, 0
  %v620 = vsel %vm351, %v437, 0
  %622 = vmatprep.subr.mxu0 0.0
  %623 = vmatpush1.msra.mxu0 0.0
  %624 = vmatprep.subr.mxu0 0.0
  %625 = vmatpush1.msra.mxu0 0.0
  %626 = vmatprep.subr.mxu0 0.0
  %627 = vmatpush1.msra.mxu0 0.0
  %628 = vmatprep.subr.mxu0 0.0
  %629 = vmatpush1.msra.mxu0 0.0
  %630 = vmatprep.subr.mxu0 0.0
  %631 = vmatpush1.msra.mxu0 0.0
  %632 = vmatprep.subr.mxu0 0.0
  %633 = vmatpush1.msra.mxu0 0.0
  %634 = vmatprep.subr.mxu0 0.0
  %635 = vmatpush1.msra.mxu0 0.0
  %636 = vmatprep.subr.mxu0 0.0
  %637 = vmatpush1.msra.mxu0 0.0
  %638 = vmatprep.subr.mxu0 0.0
  %639 = vmatpush1.msra.mxu0 0.0
  %640 = vmatprep.subr.mxu0 0.0
  %641 = vmatpush1.msra.mxu0 0.0
  %642 = vmatprep.subr.mxu0 0.0
  %643 = vmatpush1.msra.mxu0 0.0
  %644 = vmatprep.subr.mxu0 0.0
  %645 = vmatpush1.msra.mxu0 0.0
  %646 = vmatprep.subr.mxu0 0.0
  %647 = vmatpush1.msra.mxu0 0.0
  %648 = vmatprep.subr.mxu0 0.0
  %649 = vmatpush1.msra.mxu0 0.0
  %650 = vmatprep.subr.mxu0 0.0
  %651 = vmatpush1.msra.mxu0 %v613
  %652 = vmatprep.subr.mxu0 0.0
  %653 = vmatpush1.msra.mxu0 %v611
  %654 = vmatprep.subr.mxu0 0.0
  %655 = vmatpush2.msra.mxu0 0.0
  %656 = vmatprep.subr.mxu0 0.0
  %657 = vmatpush2.msra.mxu0 0.0
  %658 = vmatprep.subr.mxu0 0.0
  %659 = vmatpush2.msra.mxu0 0.0
  %660 = vmatprep.subr.mxu0 0.0
  %661 = vmatpush2.msra.mxu0 0.0
  %662 = vmatprep.subr.mxu0 0.0
  %663 = vmatpush2.msra.mxu0 0.0
  %664 = vmatprep.subr.mxu0 0.0
  %665 = vmatpush2.msra.mxu0 0.0
  %666 = vmatprep.subr.mxu0 0.0
  %667 = vmatpush2.msra.mxu0 0.0
  %668 = vmatprep.subr.mxu0 0.0
  %669 = vmatpush2.msra.mxu0 0.0
  %670 = vmatprep.subr.mxu0 0.0
  %671 = vmatpush2.msra.mxu0 0.0
  %672 = vmatprep.subr.mxu0 0.0
  %673 = vmatpush2.msra.mxu0 0.0
  %674 = vmatprep.subr.mxu0 0.0
  %675 = vmatpush2.msra.mxu0 0.0
  %676 = vmatprep.subr.mxu0 0.0
  %677 = vmatpush2.msra.mxu0 0.0
  %678 = vmatprep.subr.mxu0 0.0
  %679 = vmatpush2.msra.mxu0 0.0
  %680 = vmatprep.subr.mxu0 0.0
  %681 = vmatpush2.msra.mxu0 0.0
  %682 = vmatprep.subr.mxu0 0.0
  %683 = vmatpush2.msra.mxu0 0.0
  %684 = vmatprep.subr.mxu0 0.0
  %685 = vmatpush2.msra.mxu0 0.0
  %686 = vmatprep.mubr.f32.mxu0 0.0
  %687 = vmatmul.mubr.f32.gmra.mxu0 %v617
  %v688 = vpop.f32.mrf.mxu0
  %v689 = vadd.f32 0.0, %v688
  %v690 = vpop.f32.mrf.mxu0
  %691 = vmatprep.mubr.f32.mxu0 0.0
  %692 = vmatmul.mubr.f32.gmra.mxu0 %v620
  %v693 = vpop.f32.mrf.mxu0
  %v694 = vadd.f32 0.0, %v693
  %v695 = vpop.f32.mrf.mxu0
  %696 = vdwg.mxu0
  %697 = vrot.lane.b32.xlu0 %v140, 32
  %v698 = vpop.permute.xlu0 %697
  %699 = vrot.lane.b32.xlu0 %v146, 32
  %v700 = vpop.permute.xlu0 %699
  %v704 = vsel %vm351, %v438, 0
  %v707 = vsel %vm351, %v439, 0
  %709 = vmatprep.subr.mxu0 0.0
  %710 = vmatpush1.msra.mxu0 0.0
  %711 = vmatprep.subr.mxu0 0.0
  %712 = vmatpush1.msra.mxu0 0.0
  %713 = vmatprep.subr.mxu0 0.0
  %714 = vmatpush1.msra.mxu0 0.0
  %715 = vmatprep.subr.mxu0 0.0
  %716 = vmatpush1.msra.mxu0 0.0
  %717 = vmatprep.subr.mxu0 0.0
  %718 = vmatpush1.msra.mxu0 0.0
  %719 = vmatprep.subr.mxu0 0.0
  %720 = vmatpush1.msra.mxu0 0.0
  %721 = vmatprep.subr.mxu0 0.0
  %722 = vmatpush1.msra.mxu0 0.0
  %723 = vmatprep.subr.mxu0 0.0
  %724 = vmatpush1.msra.mxu0 0.0
  %725 = vmatprep.subr.mxu0 0.0
  %726 = vmatpush1.msra.mxu0 0.0
  %727 = vmatprep.subr.mxu0 0.0
  %728 = vmatpush1.msra.mxu0 0.0
  %729 = vmatprep.subr.mxu0 0.0
  %730 = vmatpush1.msra.mxu0 0.0
  %731 = vmatprep.subr.mxu0 0.0
  %732 = vmatpush1.msra.mxu0 0.0
  %733 = vmatprep.subr.mxu0 0.0
  %734 = vmatpush1.msra.mxu0 0.0
  %735 = vmatprep.subr.mxu0 0.0
  %736 = vmatpush1.msra.mxu0 0.0
  %737 = vmatprep.subr.mxu0 0.0
  %738 = vmatpush1.msra.mxu0 %v700
  %739 = vmatprep.subr.mxu0 0.0
  %740 = vmatpush1.msra.mxu0 %v698
  %741 = vmatprep.subr.mxu0 0.0
  %742 = vmatpush2.msra.mxu0 0.0
  %743 = vmatprep.subr.mxu0 0.0
  %744 = vmatpush2.msra.mxu0 0.0
  %745 = vmatprep.subr.mxu0 0.0
  %746 = vmatpush2.msra.mxu0 0.0
  %747 = vmatprep.subr.mxu0 0.0
  %748 = vmatpush2.msra.mxu0 0.0
  %749 = vmatprep.subr.mxu0 0.0
  %750 = vmatpush2.msra.mxu0 0.0
  %751 = vmatprep.subr.mxu0 0.0
  %752 = vmatpush2.msra.mxu0 0.0
  %753 = vmatprep.subr.mxu0 0.0
  %754 = vmatpush2.msra.mxu0 0.0
  %755 = vmatprep.subr.mxu0 0.0
  %756 = vmatpush2.msra.mxu0 0.0
  %757 = vmatprep.subr.mxu0 0.0
  %758 = vmatpush2.msra.mxu0 0.0
  %759 = vmatprep.subr.mxu0 0.0
  %760 = vmatpush2.msra.mxu0 0.0
  %761 = vmatprep.subr.mxu0 0.0
  %762 = vmatpush2.msra.mxu0 0.0
  %763 = vmatprep.subr.mxu0 0.0
  %764 = vmatpush2.msra.mxu0 0.0
  %765 = vmatprep.subr.mxu0 0.0
  %766 = vmatpush2.msra.mxu0 0.0
  %767 = vmatprep.subr.mxu0 0.0
  %768 = vmatpush2.msra.mxu0 0.0
  %769 = vmatprep.subr.mxu0 0.0
  %770 = vmatpush2.msra.mxu0 0.0
  %771 = vmatprep.subr.mxu0 0.0
  %772 = vmatpush2.msra.mxu0 0.0
  %773 = vmatprep.mubr.f32.mxu0 0.0
  %774 = vmatmul.mubr.f32.gmra.mxu0 %v704
  %v775 = vpop.f32.mrf.mxu0
  %v776 = vadd.f32 0.0, %v775
  %v777 = vpop.f32.mrf.mxu0
  %778 = vmatprep.mubr.f32.mxu0 0.0
  %779 = vmatmul.mubr.f32.gmra.mxu0 %v707
  %v780 = vpop.f32.mrf.mxu0
  %v781 = vadd.f32 0.0, %v780
  %v782 = vpop.f32.mrf.mxu0
  %783 = vdwg.mxu0
  %786 = vrot.lane.b32.xlu0 %v602, 32
  %v787 = vpop.permute.xlu0 %786
  %788 = vrot.lane.b32.xlu0 %v607, 32
  %v789 = vpop.permute.xlu0 %788
  %794 = vrot.lane.b32.xlu0 %v689, 64
  %v795 = vpop.permute.xlu0 %794
  %796 = vrot.lane.b32.xlu0 %v694, 64
  %v797 = vpop.permute.xlu0 %796
  %802 = vrot.lane.b32.xlu0 %v776, 96
  %v803 = vpop.permute.xlu0 %802
  %804 = vrot.lane.b32.xlu0 %v781, 96
  %v805 = vpop.permute.xlu0 %804
  %vm808 = vcmask 261120
  %v809 = vsel %vm808, %v513, %v787
  %v810 = vsel %vm808, %v518, %v789
  %vm811 = vcmask 523264
  %v812 = vsel %vm811, %v809, %v795
  %v813 = vsel %vm811, %v810, %v797
  %vm814 = vcmask 785408
  %v815 = vsel %vm814, %v812, %v803
  %v816 = vsel %vm814, %v813, %v805
  %v817 = vld [vmem:[%s4] sm:$0x1]
  %v819 = vlaneseq
  %v820 = vshrl.u32 %v819, 7
  %v821 = vsub.s32 0, %v820
  %v822 = vrot.slane %v817, %v821
  %v824 = vmul.f32 %v815, %v822
  %v825 = vmul.f32 %v816, %v822
  %v826 = vld [vmem:[%s5] sm:$0x1]
  %v828 = vlaneseq
  %v829 = vshrl.u32 %v828, 7
  %v830 = vsub.s32 0, %v829
  %v831 = vrot.slane %v826, %v830
  %v833 = vadd.f32 %v824, %v831
  %v834 = vadd.f32 %v825, %v831
  %v835 = vmax.f32 %v833, 0.0
  %v836 = vmax.f32 %v834, 0.0
  %v837 = vld [vmem:[%s6] sm:$0xff]
  %v838 = vld [vmem:[%s6 + $0x8] sm:$0xff]
  %v839 = vld [vmem:[%s6 + $0x10] sm:$0xff]
  %v840 = vld [vmem:[%s6 + $0x18] sm:$0xff]
  %v841 = vld [vmem:[%s6 + $0x20] sm:$0xff]
  %v842 = vld [vmem:[%s6 + $0x28] sm:$0xff]
  %v843 = vld [vmem:[%s6 + $0x30] sm:$0xff]
  %v844 = vld [vmem:[%s6 + $0x38] sm:$0xff]
  %v845 = vld [vmem:[%s6 + $0x40] sm:$0xff]
  %v846 = vld [vmem:[%s6 + $0x48] sm:$0xff]
  %v847 = vld [vmem:[%s6 + $0x50] sm:$0xff]
  %v848 = vld [vmem:[%s6 + $0x58] sm:$0xff]
  %v849 = vld [vmem:[%s6 + $0x60] sm:$0xff]
  %v850 = vld [vmem:[%s6 + $0x68] sm:$0xff]
  %v851 = vld [vmem:[%s6 + $0x70] sm:$0xff]
  %v852 = vld [vmem:[%s6 + $0x78] sm:$0xff]
  %v853 = vld [vmem:[%s6 + $0x80] sm:$0xff]
  %v854 = vld [vmem:[%s6 + $0x88] sm:$0xff]
  %v855 = vld [vmem:[%s6 + $0x90] sm:$0xff]
  %v856 = vld [vmem:[%s6 + $0x98] sm:$0xff]
  %v857 = vld [vmem:[%s6 + $0xa0] sm:$0xff]
  %v858 = vld [vmem:[%s6 + $0xa8] sm:$0xff]
  %v859 = vld [vmem:[%s6 + $0xb0] sm:$0xff]
  %v860 = vld [vmem:[%s6 + $0xb8] sm:$0xff]
  %v861 = vld [vmem:[%s6 + $0xc0] sm:$0xff]
  %v862 = vld [vmem:[%s6 + $0xc8] sm:$0xff]
  %v863 = vld [vmem:[%s6 + $0xd0] sm:$0xff]
  %v864 = vld [vmem:[%s6 + $0xd8] sm:$0xff]
  %v865 = vld [vmem:[%s6 + $0xe0] sm:$0xff]
  %v866 = vld [vmem:[%s6 + $0xe8] sm:$0xff]
  %v867 = vld [vmem:[%s6 + $0xf0] sm:$0xff]
  %v868 = vld [vmem:[%s6 + $0xf8] sm:$0xff]
  %869 = vmatprep.subr.mxu0 %v868
  %870 = vmatpush1.msra.mxu0 %v867
  %871 = vmatprep.subr.mxu0 %v866
  %872 = vmatpush1.msra.mxu0 %v865
  %873 = vmatprep.subr.mxu0 %v864
  %874 = vmatpush1.msra.mxu0 %v863
  %875 = vmatprep.subr.mxu0 %v862
  %876 = vmatpush1.msra.mxu0 %v861
  %877 = vmatprep.subr.mxu0 %v860
  %878 = vmatpush1.msra.mxu0 %v859
  %879 = vmatprep.subr.mxu0 %v858
  %880 = vmatpush1.msra.mxu0 %v857
  %881 = vmatprep.subr.mxu0 %v856
  %882 = vmatpush1.msra.mxu0 %v855
  %883 = vmatprep.subr.mxu0 %v854
  %884 = vmatpush1.msra.mxu0 %v853
  %885 = vmatprep.subr.mxu0 %v852
  %886 = vmatpush1.msra.mxu0 %v851
  %887 = vmatprep.subr.mxu0 %v850
  %888 = vmatpush1.msra.mxu0 %v849
  %889 = vmatprep.subr.mxu0 %v848
  %890 = vmatpush1.msra.mxu0 %v847
  %891 = vmatprep.subr.mxu0 %v846
  %892 = vmatpush1.msra.mxu0 %v845
  %893 = vmatprep.subr.mxu0 %v844
  %894 = vmatpush1.msra.mxu0 %v843
  %895 = vmatprep.subr.mxu0 %v842
  %896 = vmatpush1.msra.mxu0 %v841
  %897 = vmatprep.subr.mxu0 %v840
  %898 = vmatpush1.msra.mxu0 %v839
  %899 = vmatprep.subr.mxu0 %v838
  %900 = vmatpush1.msra.mxu0 %v837
  %901 = vmatprep.subr.mxu0 0.0
  %902 = vmatpush2.msra.mxu0 0.0
  %903 = vmatprep.subr.mxu0 0.0
  %904 = vmatpush2.msra.mxu0 0.0
  %905 = vmatprep.subr.mxu0 0.0
  %906 = vmatpush2.msra.mxu0 0.0
  %907 = vmatprep.subr.mxu0 0.0
  %908 = vmatpush2.msra.mxu0 0.0
  %909 = vmatprep.subr.mxu0 0.0
  %910 = vmatpush2.msra.mxu0 0.0
  %911 = vmatprep.subr.mxu0 0.0
  %912 = vmatpush2.msra.mxu0 0.0
  %913 = vmatprep.subr.mxu0 0.0
  %914 = vmatpush2.msra.mxu0 0.0
  %915 = vmatprep.subr.mxu0 0.0
  %916 = vmatpush2.msra.mxu0 0.0
  %917 = vmatprep.subr.mxu0 0.0
  %918 = vmatpush2.msra.mxu0 0.0
  %919 = vmatprep.subr.mxu0 0.0
  %920 = vmatpush2.msra.mxu0 0.0
  %921 = vmatprep.subr.mxu0 0.0
  %922 = vmatpush2.msra.mxu0 0.0
  %923 = vmatprep.subr.mxu0 0.0
  %924 = vmatpush2.msra.mxu0 0.0
  %925 = vmatprep.subr.mxu0 0.0
  %926 = vmatpush2.msra.mxu0 0.0
  %927 = vmatprep.subr.mxu0 0.0
  %928 = vmatpush2.msra.mxu0 0.0
  %929 = vmatprep.subr.mxu0 0.0
  %930 = vmatpush2.msra.mxu0 0.0
  %931 = vmatprep.subr.mxu0 0.0
  %932 = vmatpush2.msra.mxu0 0.0
  %933 = vmatprep.mubr.f32.mxu0 0.0
  %934 = vmatmul.mubr.f32.gmra.mxu0 %v835
  %v935 = vpop.f32.mrf.mxu0
  %v936 = vadd.f32 0.0, %v935
  %v937 = vpop.f32.mrf.mxu0
  %v938 = vadd.f32 0.0, %v937
  %939 = vmatprep.mubr.f32.mxu0 0.0
  %940 = vmatmul.mubr.f32.gmra.mxu0 %v836
  %v941 = vpop.f32.mrf.mxu0
  %v942 = vadd.f32 0.0, %v941
  %v943 = vpop.f32.mrf.mxu0
  %v944 = vadd.f32 0.0, %v943
  %945 = vdwg.mxu0
  %946 = vxpose.xlu0.b32.start [1/16] %v938, 128
  %947 = vxpose.xlu0.b32.cont [2/16] %v944, 128
  %948 = vxpose.xlu0.b32.cont [3/16] 0.0, 128
  %949 = vxpose.xlu0.b32.cont [4/16] 0.0, 128
  %950 = vxpose.xlu0.b32.cont [5/16] 0.0, 128
  %951 = vxpose.xlu0.b32.cont [6/16] 0.0, 128
  %952 = vxpose.xlu0.b32.cont [7/16] 0.0, 128
  %953 = vxpose.xlu0.b32.cont [8/16] 0.0, 128
  %954 = vxpose.xlu0.b32.cont [9/16] 0.0, 128
  %955 = vxpose.xlu0.b32.cont [10/16] 0.0, 128
  %956 = vxpose.xlu0.b32.cont [11/16] 0.0, 128
  %957 = vxpose.xlu0.b32.cont [12/16] 0.0, 128
  %958 = vxpose.xlu0.b32.cont [13/16] 0.0, 128
  %959 = vxpose.xlu0.b32.cont [14/16] 0.0, 128
  %960 = vxpose.xlu0.b32.cont [15/16] 0.0, 128
  %961 = vxpose.xlu0.b32.end [16/16] 0.0, 128
  %v962 = vpop.trf.xlu0
  %v963 = vpop.trf.xlu0
  %v964 = vpop.trf.xlu0
  %v965 = vpop.trf.xlu0
  %v966 = vpop.trf.xlu0
  %v967 = vpop.trf.xlu0
  %v968 = vpop.trf.xlu0
  %v969 = vpop.trf.xlu0
  %v970 = vpop.trf.xlu0
  %v971 = vpop.trf.xlu0
  %v972 = vpop.trf.xlu0
  %v973 = vpop.trf.xlu0
  %v974 = vpop.trf.xlu0
  %v975 = vpop.trf.xlu0
  %v976 = vpop.trf.xlu0
  %v977 = vpop.trf.xlu0
  %980 = vrot.lane.b32.xlu0 %v938, 124
  %v981 = vpop.permute.xlu0 %980
  %982 = vrot.lane.b32.xlu0 %v944, 124
  %v983 = vpop.permute.xlu0 %982
  %986 = vxpose.xlu0.b32.start [1/16] %v981, 128
  %987 = vxpose.xlu0.b32.cont [2/16] %v983, 128
  %988 = vxpose.xlu0.b32.cont [3/16] 0.0, 128
  %989 = vxpose.xlu0.b32.cont [4/16] 0.0, 128
  %990 = vxpose.xlu0.b32.cont [5/16] 0.0, 128
  %991 = vxpose.xlu0.b32.cont [6/16] 0.0, 128
  %992 = vxpose.xlu0.b32.cont [7/16] 0.0, 128
  %993 = vxpose.xlu0.b32.cont [8/16] 0.0, 128
  %994 = vxpose.xlu0.b32.cont [9/16] 0.0, 128
  %995 = vxpose.xlu0.b32.cont [10/16] 0.0, 128
  %996 = vxpose.xlu0.b32.cont [11/16] 0.0, 128
  %997 = vxpose.xlu0.b32.cont [12/16] 0.0, 128
  %998 = vxpose.xlu0.b32.cont [13/16] 0.0, 128
  %999 = vxpose.xlu0.b32.cont [14/16] 0.0, 128
  %1000 = vxpose.xlu0.b32.cont [15/16] 0.0, 128
  %1001 = vxpose.xlu0.b32.end [16/16] 0.0, 128
  %v1002 = vpop.trf.xlu0
  %v1003 = vpop.trf.xlu0
  %v1004 = vpop.trf.xlu0
  %v1005 = vpop.trf.xlu0
  %v1006 = vpop.trf.xlu0
  %v1007 = vpop.trf.xlu0
  %v1008 = vpop.trf.xlu0
  %v1009 = vpop.trf.xlu0
  %v1010 = vpop.trf.xlu0
  %v1011 = vpop.trf.xlu0
  %v1012 = vpop.trf.xlu0
  %v1013 = vpop.trf.xlu0
  %v1014 = vpop.trf.xlu0
  %v1015 = vpop.trf.xlu0
  %v1016 = vpop.trf.xlu0
  %v1017 = vpop.trf.xlu0
  %v1018 = vlaneseq
  %v1019 = vshrl.u32 %v1018, 7
  %v1020 = vsub.s32 0, %v1019
  %v1021 = vrot.slane %v1002, %v1020
  %1023 = vbcast.lane.b32.xlu0 %v1021, 256
  %v1024 = vpop.permute.xlu0 %1023
  %s1026 = sor.u32 256, 8
  %1027 = vbcast.lane.b32.xlu0 %v1021, %s1026
  %v1028 = vpop.permute.xlu0 %1027
  %v1029 = vlaneseq
  %v1030 = vshrl.u32 %v1029, 7
  %v1031 = vsub.s32 1, %v1030
  %v1032 = vrot.slane %v1002, %v1031
  %1034 = vbcast.lane.b32.xlu0 %v1032, 256
  %v1035 = vpop.permute.xlu0 %1034
  %s1037 = sor.u32 256, 8
  %1038 = vbcast.lane.b32.xlu0 %v1032, %s1037
  %v1039 = vpop.permute.xlu0 %1038
  %v1040 = vlaneseq
  %v1041 = vshrl.u32 %v1040, 7
  %v1042 = vsub.s32 2, %v1041
  %v1043 = vrot.slane %v1002, %v1042
  %1045 = vbcast.lane.b32.xlu0 %v1043, 256
  %v1046 = vpop.permute.xlu0 %1045
  %s1048 = sor.u32 256, 8
  %1049 = vbcast.lane.b32.xlu0 %v1043, %s1048
  %v1050 = vpop.permute.xlu0 %1049
  %v1051 = vlaneseq
  %v1052 = vshrl.u32 %v1051, 7
  %v1053 = vsub.s32 3, %v1052
  %v1054 = vrot.slane %v1002, %v1053
  %1056 = vbcast.lane.b32.xlu0 %v1054, 256
  %v1057 = vpop.permute.xlu0 %1056
  %s1059 = sor.u32 256, 8
  %1060 = vbcast.lane.b32.xlu0 %v1054, %s1059
  %v1061 = vpop.permute.xlu0 %1060
  %v1064 = vunpack.c.l.s4 1966171168
  %v1065 = vunpack.c.0.s8 %v1064
  %v1066 = vlaneseq
  %v1067 = vshrl.u32 %v1066, 7
  %v1068 = vsub.s32 %v1065, %v1067
  %v1069 = vrot.slane %v962, %v1068
  %v1070 = vcombine.high %v1069, %v1069
  %v1072 = vunpack.c.l.s4 1966171168
  %v1073 = vunpack.c.0.s8 %v1072
  %v1074 = vlaneseq
  %v1075 = vshrl.u32 %v1074, 7
  %v1076 = vsub.s32 %v1073, %v1075
  %v1077 = vrot.slane %v1069, %v1076
  %v1079 = vunpack.c.l.s4 1966171168
  %v1080 = vunpack.c.0.s8 %v1079
  %v1081 = vlaneseq
  %v1082 = vshrl.u32 %v1081, 7
  %v1083 = vsub.s32 %v1080, %v1082
  %v1084 = vrot.slane %v1070, %v1083
  %v1085 = vcombine.high %v1077, %v1077
  %v1086 = vcombine.high %v1084, %v1084
  %v1087 = vlaneseq
  %v1088 = vshrl.u32 %v1087, 7
  %v1089 = vsub.s32 0, %v1088
  %v1090 = vrot.slane %v1077, %v1089
  %v1091 = vlaneseq
  %v1092 = vshrl.u32 %v1091, 7
  %v1093 = vsub.s32 0, %v1092
  %v1094 = vrot.slane %v1084, %v1093
  %v1095 = vlaneseq
  %v1096 = vshrl.u32 %v1095, 7
  %v1097 = vsub.s32 0, %v1096
  %v1098 = vrot.slane %v1085, %v1097
  %v1099 = vlaneseq
  %v1100 = vshrl.u32 %v1099, 7
  %v1101 = vsub.s32 0, %v1100
  %v1102 = vrot.slane %v1086, %v1101
  %v1107 = vadd.f32 %v1024, %v1090
  %v1108 = vadd.f32 %v1028, %v1090
  %v1109 = vadd.f32 %v1035, %v1094
  %v1110 = vadd.f32 %v1039, %v1094
  %v1111 = vadd.f32 %v1046, %v1098
  %v1112 = vadd.f32 %v1050, %v1098
  %v1113 = vadd.f32 %v1057, %v1102
  %v1114 = vadd.f32 %v1061, %v1102
  %vm1115 = vcmp.gt.f32.partialorder %v1107, 0.0
  %vm1116 = vcmp.gt.f32.partialorder %v1108, 0.0
  %vm1117 = vcmp.gt.f32.partialorder %v1109, 0.0
  %vm1118 = vcmp.gt.f32.partialorder %v1110, 0.0
  %vm1119 = vcmp.gt.f32.partialorder %v1111, 0.0
  %vm1120 = vcmp.gt.f32.partialorder %v1112, 0.0
  %vm1121 = vcmp.gt.f32.partialorder %v1113, 0.0
  %vm1122 = vcmp.gt.f32.partialorder %v1114, 0.0
  %v1123 = vmul.f32 %v1107, 0.2
  %v1124 = vmul.f32 %v1108, 0.2
  %v1125 = vmul.f32 %v1109, 0.2
  %v1126 = vmul.f32 %v1110, 0.2
  %v1127 = vmul.f32 %v1111, 0.2
  %v1128 = vmul.f32 %v1112, 0.2
  %v1129 = vmul.f32 %v1113, 0.2
  %v1130 = vmul.f32 %v1114, 0.2
  %v1131 = vsel %vm1115, %v1107, %v1123
  %v1132 = vsel %vm1116, %v1108, %v1124
  %v1133 = vsel %vm1117, %v1109, %v1125
  %v1134 = vsel %vm1118, %v1110, %v1126
  %v1135 = vsel %vm1119, %v1111, %v1127
  %v1136 = vsel %vm1120, %v1112, %v1128
  %v1137 = vsel %vm1121, %v1113, %v1129
  %v1138 = vsel %vm1122, %v1114, %v1130
  %v1139 = vadd.f32 %v1131, %v60
  %v1140 = vadd.f32 %v1132, %v61
  %v1141 = vadd.f32 %v1133, %v60
  %v1142 = vadd.f32 %v1134, %v61
  %v1143 = vadd.f32 %v1135, %v60
  %v1144 = vadd.f32 %v1136, %v61
  %v1145 = vadd.f32 %v1137, %v60
  %v1146 = vadd.f32 %v1138, %v61
  %v1147 = vsel %vm351, %v1139, -inf
  %1148 = vmax.xlane.f32.xlu0 %v1147
  %v1149 = vpop.xlane.xlu0 %1148
  %v1150 = vsel %vm351, %v1140, -inf
  %1151 = vmax.xlane.f32.xlu0 %v1150
  %v1152 = vpop.xlane.xlu0 %1151
  %v1153 = vsel %vm351, %v1141, -inf
  %1154 = vmax.xlane.f32.xlu0 %v1153
  %v1155 = vpop.xlane.xlu0 %1154
  %v1156 = vsel %vm351, %v1142, -inf
  %1157 = vmax.xlane.f32.xlu0 %v1156
  %v1158 = vpop.xlane.xlu0 %1157
  %v1159 = vsel %vm351, %v1143, -inf
  %1160 = vmax.xlane.f32.xlu0 %v1159
  %v1161 = vpop.xlane.xlu0 %1160
  %v1162 = vsel %vm351, %v1144, -inf
  %1163 = vmax.xlane.f32.xlu0 %v1162
  %v1164 = vpop.xlane.xlu0 %1163
  %v1165 = vsel %vm351, %v1145, -inf
  %1166 = vmax.xlane.f32.xlu0 %v1165
  %v1167 = vpop.xlane.xlu0 %1166
  %v1168 = vsel %vm351, %v1146, -inf
  %1169 = vmax.xlane.f32.xlu0 %v1168
  %v1170 = vpop.xlane.xlu0 %1169
  %v1171 = vsub.f32 %v1139, %v1149
  %v1172 = vsub.f32 %v1140, %v1152
  %v1173 = vsub.f32 %v1141, %v1155
  %v1174 = vsub.f32 %v1142, %v1158
  %v1175 = vsub.f32 %v1143, %v1161
  %v1176 = vsub.f32 %v1144, %v1164
  %v1177 = vsub.f32 %v1145, %v1167
  %v1178 = vsub.f32 %v1146, %v1170
  %v1179 = vmul.f32 %v1171, 1.442695
  %v1180 = vpow.pop %v1179
  %v1181 = vmul.f32 %v1172, 1.442695
  %v1182 = vpow.pop %v1181
  %v1183 = vmul.f32 %v1173, 1.442695
  %v1184 = vpow.pop %v1183
  %v1185 = vmul.f32 %v1174, 1.442695
  %v1186 = vpow.pop %v1185
  %v1187 = vmul.f32 %v1175, 1.442695
  %v1188 = vpow.pop %v1187
  %v1189 = vmul.f32 %v1176, 1.442695
  %v1190 = vpow.pop %v1189
  %v1191 = vmul.f32 %v1177, 1.442695
  %v1192 = vpow.pop %v1191
  %v1193 = vmul.f32 %v1178, 1.442695
  %v1194 = vpow.pop %v1193
  %v1195 = vsel %vm351, %v1180, 0.0
  %1196 = vadd.xlane.f32.xlu0 %v1195
  %v1197 = vpop.xlane.xlu0 %1196
  %v1198 = vsel %vm351, %v1182, 0.0
  %1199 = vadd.xlane.f32.xlu0 %v1198
  %v1200 = vpop.xlane.xlu0 %1199
  %v1201 = vsel %vm351, %v1184, 0.0
  %1202 = vadd.xlane.f32.xlu0 %v1201
  %v1203 = vpop.xlane.xlu0 %1202
  %v1204 = vsel %vm351, %v1186, 0.0
  %1205 = vadd.xlane.f32.xlu0 %v1204
  %v1206 = vpop.xlane.xlu0 %1205
  %v1207 = vsel %vm351, %v1188, 0.0
  %1208 = vadd.xlane.f32.xlu0 %v1207
  %v1209 = vpop.xlane.xlu0 %1208
  %v1210 = vsel %vm351, %v1190, 0.0
  %1211 = vadd.xlane.f32.xlu0 %v1210
  %v1212 = vpop.xlane.xlu0 %1211
  %v1213 = vsel %vm351, %v1192, 0.0
  %1214 = vadd.xlane.f32.xlu0 %v1213
  %v1215 = vpop.xlane.xlu0 %1214
  %v1216 = vsel %vm351, %v1194, 0.0
  %1217 = vadd.xlane.f32.xlu0 %v1216
  %v1218 = vpop.xlane.xlu0 %1217
  %v1219 = vrcp.pop %v1197
  %v1220 = vrcp.pop %v1200
  %v1221 = vrcp.pop %v1203
  %v1222 = vrcp.pop %v1206
  %v1223 = vrcp.pop %v1209
  %v1224 = vrcp.pop %v1212
  %v1225 = vrcp.pop %v1215
  %v1226 = vrcp.pop %v1218
  %v1227 = vmul.f32 %v1180, %v1219
  %v1228 = vmul.f32 %v1182, %v1220
  %v1229 = vmul.f32 %v1184, %v1221
  %v1230 = vmul.f32 %v1186, %v1222
  %v1231 = vmul.f32 %v1188, %v1223
  %v1232 = vmul.f32 %v1190, %v1224
  %v1233 = vmul.f32 %v1192, %v1225
  %v1234 = vmul.f32 %v1194, %v1226
  %v1236 = vsel %vm351, %v1227, 0
  %v1239 = vsel %vm351, %v1228, 0
  %1241 = vmatprep.subr.mxu0 0.0
  %1242 = vmatpush1.msra.mxu0 0.0
  %1243 = vmatprep.subr.mxu0 0.0
  %1244 = vmatpush1.msra.mxu0 0.0
  %1245 = vmatprep.subr.mxu0 0.0
  %1246 = vmatpush1.msra.mxu0 0.0
  %1247 = vmatprep.subr.mxu0 0.0
  %1248 = vmatpush1.msra.mxu0 0.0
  %1249 = vmatprep.subr.mxu0 0.0
  %1250 = vmatpush1.msra.mxu0 0.0
  %1251 = vmatprep.subr.mxu0 0.0
  %1252 = vmatpush1.msra.mxu0 0.0
  %1253 = vmatprep.subr.mxu0 0.0
  %1254 = vmatpush1.msra.mxu0 0.0
  %1255 = vmatprep.subr.mxu0 0.0
  %1256 = vmatpush1.msra.mxu0 0.0
  %1257 = vmatprep.subr.mxu0 0.0
  %1258 = vmatpush1.msra.mxu0 0.0
  %1259 = vmatprep.subr.mxu0 0.0
  %1260 = vmatpush1.msra.mxu0 0.0
  %1261 = vmatprep.subr.mxu0 0.0
  %1262 = vmatpush1.msra.mxu0 0.0
  %1263 = vmatprep.subr.mxu0 0.0
  %1264 = vmatpush1.msra.mxu0 0.0
  %1265 = vmatprep.subr.mxu0 0.0
  %1266 = vmatpush1.msra.mxu0 0.0
  %1267 = vmatprep.subr.mxu0 0.0
  %1268 = vmatpush1.msra.mxu0 0.0
  %1269 = vmatprep.subr.mxu0 0.0
  %1270 = vmatpush1.msra.mxu0 %v942
  %1271 = vmatprep.subr.mxu0 0.0
  %1272 = vmatpush1.msra.mxu0 %v936
  %1273 = vmatprep.subr.mxu0 0.0
  %1274 = vmatpush2.msra.mxu0 0.0
  %1275 = vmatprep.subr.mxu0 0.0
  %1276 = vmatpush2.msra.mxu0 0.0
  %1277 = vmatprep.subr.mxu0 0.0
  %1278 = vmatpush2.msra.mxu0 0.0
  %1279 = vmatprep.subr.mxu0 0.0
  %1280 = vmatpush2.msra.mxu0 0.0
  %1281 = vmatprep.subr.mxu0 0.0
  %1282 = vmatpush2.msra.mxu0 0.0
  %1283 = vmatprep.subr.mxu0 0.0
  %1284 = vmatpush2.msra.mxu0 0.0
  %1285 = vmatprep.subr.mxu0 0.0
  %1286 = vmatpush2.msra.mxu0 0.0
  %1287 = vmatprep.subr.mxu0 0.0
  %1288 = vmatpush2.msra.mxu0 0.0
  %1289 = vmatprep.subr.mxu0 0.0
  %1290 = vmatpush2.msra.mxu0 0.0
  %1291 = vmatprep.subr.mxu0 0.0
  %1292 = vmatpush2.msra.mxu0 0.0
  %1293 = vmatprep.subr.mxu0 0.0
  %1294 = vmatpush2.msra.mxu0 0.0
  %1295 = vmatprep.subr.mxu0 0.0
  %1296 = vmatpush2.msra.mxu0 0.0
  %1297 = vmatprep.subr.mxu0 0.0
  %1298 = vmatpush2.msra.mxu0 0.0
  %1299 = vmatprep.subr.mxu0 0.0
  %1300 = vmatpush2.msra.mxu0 0.0
  %1301 = vmatprep.subr.mxu0 0.0
  %1302 = vmatpush2.msra.mxu0 0.0
  %1303 = vmatprep.subr.mxu0 0.0
  %1304 = vmatpush2.msra.mxu0 0.0
  %1305 = vmatprep.mubr.f32.mxu0 0.0
  %1306 = vmatmul.mubr.f32.gmra.mxu0 %v1236
  %v1307 = vpop.f32.mrf.mxu0
  %v1308 = vadd.f32 0.0, %v1307
  %v1309 = vpop.f32.mrf.mxu0
  %1310 = vmatprep.mubr.f32.mxu0 0.0
  %1311 = vmatmul.mubr.f32.gmra.mxu0 %v1239
  %v1312 = vpop.f32.mrf.mxu0
  %v1313 = vadd.f32 0.0, %v1312
  %v1314 = vpop.f32.mrf.mxu0
  %1315 = vdwg.mxu0
  %1318 = vrot.lane.b32.xlu0 %v936, 96
  %v1319 = vpop.permute.xlu0 %1318
  %1320 = vrot.lane.b32.xlu0 %v942, 96
  %v1321 = vpop.permute.xlu0 %1320
  %v1325 = vsel %vm351, %v1229, 0
  %v1328 = vsel %vm351, %v1230, 0
  %1330 = vmatprep.subr.mxu0 0.0
  %1331 = vmatpush1.msra.mxu0 0.0
  %1332 = vmatprep.subr.mxu0 0.0
  %1333 = vmatpush1.msra.mxu0 0.0
  %1334 = vmatprep.subr.mxu0 0.0
  %1335 = vmatpush1.msra.mxu0 0.0
  %1336 = vmatprep.subr.mxu0 0.0
  %1337 = vmatpush1.msra.mxu0 0.0
  %1338 = vmatprep.subr.mxu0 0.0
  %1339 = vmatpush1.msra.mxu0 0.0
  %1340 = vmatprep.subr.mxu0 0.0
  %1341 = vmatpush1.msra.mxu0 0.0
  %1342 = vmatprep.subr.mxu0 0.0
  %1343 = vmatpush1.msra.mxu0 0.0
  %1344 = vmatprep.subr.mxu0 0.0
  %1345 = vmatpush1.msra.mxu0 0.0
  %1346 = vmatprep.subr.mxu0 0.0
  %1347 = vmatpush1.msra.mxu0 0.0
  %1348 = vmatprep.subr.mxu0 0.0
  %1349 = vmatpush1.msra.mxu0 0.0
  %1350 = vmatprep.subr.mxu0 0.0
  %1351 = vmatpush1.msra.mxu0 0.0
  %1352 = vmatprep.subr.mxu0 0.0
  %1353 = vmatpush1.msra.mxu0 0.0
  %1354 = vmatprep.subr.mxu0 0.0
  %1355 = vmatpush1.msra.mxu0 0.0
  %1356 = vmatprep.subr.mxu0 0.0
  %1357 = vmatpush1.msra.mxu0 0.0
  %1358 = vmatprep.subr.mxu0 0.0
  %1359 = vmatpush1.msra.mxu0 %v1321
  %1360 = vmatprep.subr.mxu0 0.0
  %1361 = vmatpush1.msra.mxu0 %v1319
  %1362 = vmatprep.subr.mxu0 0.0
  %1363 = vmatpush2.msra.mxu0 0.0
  %1364 = vmatprep.subr.mxu0 0.0
  %1365 = vmatpush2.msra.mxu0 0.0
  %1366 = vmatprep.subr.mxu0 0.0
  %1367 = vmatpush2.msra.mxu0 0.0
  %1368 = vmatprep.subr.mxu0 0.0
  %1369 = vmatpush2.msra.mxu0 0.0
  %1370 = vmatprep.subr.mxu0 0.0
  %1371 = vmatpush2.msra.mxu0 0.0
  %1372 = vmatprep.subr.mxu0 0.0
  %1373 = vmatpush2.msra.mxu0 0.0
  %1374 = vmatprep.subr.mxu0 0.0
  %1375 = vmatpush2.msra.mxu0 0.0
  %1376 = vmatprep.subr.mxu0 0.0
  %1377 = vmatpush2.msra.mxu0 0.0
  %1378 = vmatprep.subr.mxu0 0.0
  %1379 = vmatpush2.msra.mxu0 0.0
  %1380 = vmatprep.subr.mxu0 0.0
  %1381 = vmatpush2.msra.mxu0 0.0
  %1382 = vmatprep.subr.mxu0 0.0
  %1383 = vmatpush2.msra.mxu0 0.0
  %1384 = vmatprep.subr.mxu0 0.0
  %1385 = vmatpush2.msra.mxu0 0.0
  %1386 = vmatprep.subr.mxu0 0.0
  %1387 = vmatpush2.msra.mxu0 0.0
  %1388 = vmatprep.subr.mxu0 0.0
  %1389 = vmatpush2.msra.mxu0 0.0
  %1390 = vmatprep.subr.mxu0 0.0
  %1391 = vmatpush2.msra.mxu0 0.0
  %1392 = vmatprep.subr.mxu0 0.0
  %1393 = vmatpush2.msra.mxu0 0.0
  %1394 = vmatprep.mubr.f32.mxu0 0.0
  %1395 = vmatmul.mubr.f32.gmra.mxu0 %v1325
  %v1396 = vpop.f32.mrf.mxu0
  %v1397 = vadd.f32 0.0, %v1396
  %v1398 = vpop.f32.mrf.mxu0
  %1399 = vmatprep.mubr.f32.mxu0 0.0
  %1400 = vmatmul.mubr.f32.gmra.mxu0 %v1328
  %v1401 = vpop.f32.mrf.mxu0
  %v1402 = vadd.f32 0.0, %v1401
  %v1403 = vpop.f32.mrf.mxu0
  %1404 = vdwg.mxu0
  %1405 = vrot.lane.b32.xlu0 %v936, 64
  %v1406 = vpop.permute.xlu0 %1405
  %1407 = vrot.lane.b32.xlu0 %v942, 64
  %v1408 = vpop.permute.xlu0 %1407
  %v1412 = vsel %vm351, %v1231, 0
  %v1415 = vsel %vm351, %v1232, 0
  %1417 = vmatprep.subr.mxu0 0.0
  %1418 = vmatpush1.msra.mxu0 0.0
  %1419 = vmatprep.subr.mxu0 0.0
  %1420 = vmatpush1.msra.mxu0 0.0
  %1421 = vmatprep.subr.mxu0 0.0
  %1422 = vmatpush1.msra.mxu0 0.0
  %1423 = vmatprep.subr.mxu0 0.0
  %1424 = vmatpush1.msra.mxu0 0.0
  %1425 = vmatprep.subr.mxu0 0.0
  %1426 = vmatpush1.msra.mxu0 0.0
  %1427 = vmatprep.subr.mxu0 0.0
  %1428 = vmatpush1.msra.mxu0 0.0
  %1429 = vmatprep.subr.mxu0 0.0
  %1430 = vmatpush1.msra.mxu0 0.0
  %1431 = vmatprep.subr.mxu0 0.0
  %1432 = vmatpush1.msra.mxu0 0.0
  %1433 = vmatprep.subr.mxu0 0.0
  %1434 = vmatpush1.msra.mxu0 0.0
  %1435 = vmatprep.subr.mxu0 0.0
  %1436 = vmatpush1.msra.mxu0 0.0
  %1437 = vmatprep.subr.mxu0 0.0
  %1438 = vmatpush1.msra.mxu0 0.0
  %1439 = vmatprep.subr.mxu0 0.0
  %1440 = vmatpush1.msra.mxu0 0.0
  %1441 = vmatprep.subr.mxu0 0.0
  %1442 = vmatpush1.msra.mxu0 0.0
  %1443 = vmatprep.subr.mxu0 0.0
  %1444 = vmatpush1.msra.mxu0 0.0
  %1445 = vmatprep.subr.mxu0 0.0
  %1446 = vmatpush1.msra.mxu0 %v1408
  %1447 = vmatprep.subr.mxu0 0.0
  %1448 = vmatpush1.msra.mxu0 %v1406
  %1449 = vmatprep.subr.mxu0 0.0
  %1450 = vmatpush2.msra.mxu0 0.0
  %1451 = vmatprep.subr.mxu0 0.0
  %1452 = vmatpush2.msra.mxu0 0.0
  %1453 = vmatprep.subr.mxu0 0.0
  %1454 = vmatpush2.msra.mxu0 0.0
  %1455 = vmatprep.subr.mxu0 0.0
  %1456 = vmatpush2.msra.mxu0 0.0
  %1457 = vmatprep.subr.mxu0 0.0
  %1458 = vmatpush2.msra.mxu0 0.0
  %1459 = vmatprep.subr.mxu0 0.0
  %1460 = vmatpush2.msra.mxu0 0.0
  %1461 = vmatprep.subr.mxu0 0.0
  %1462 = vmatpush2.msra.mxu0 0.0
  %1463 = vmatprep.subr.mxu0 0.0
  %1464 = vmatpush2.msra.mxu0 0.0
  %1465 = vmatprep.subr.mxu0 0.0
  %1466 = vmatpush2.msra.mxu0 0.0
  %1467 = vmatprep.subr.mxu0 0.0
  %1468 = vmatpush2.msra.mxu0 0.0
  %1469 = vmatprep.subr.mxu0 0.0
  %1470 = vmatpush2.msra.mxu0 0.0
  %1471 = vmatprep.subr.mxu0 0.0
  %1472 = vmatpush2.msra.mxu0 0.0
  %1473 = vmatprep.subr.mxu0 0.0
  %1474 = vmatpush2.msra.mxu0 0.0
  %1475 = vmatprep.subr.mxu0 0.0
  %1476 = vmatpush2.msra.mxu0 0.0
  %1477 = vmatprep.subr.mxu0 0.0
  %1478 = vmatpush2.msra.mxu0 0.0
  %1479 = vmatprep.subr.mxu0 0.0
  %1480 = vmatpush2.msra.mxu0 0.0
  %1481 = vmatprep.mubr.f32.mxu0 0.0
  %1482 = vmatmul.mubr.f32.gmra.mxu0 %v1412
  %v1483 = vpop.f32.mrf.mxu0
  %v1484 = vadd.f32 0.0, %v1483
  %v1485 = vpop.f32.mrf.mxu0
  %1486 = vmatprep.mubr.f32.mxu0 0.0
  %1487 = vmatmul.mubr.f32.gmra.mxu0 %v1415
  %v1488 = vpop.f32.mrf.mxu0
  %v1489 = vadd.f32 0.0, %v1488
  %v1490 = vpop.f32.mrf.mxu0
  %1491 = vdwg.mxu0
  %1492 = vrot.lane.b32.xlu0 %v936, 32
  %v1493 = vpop.permute.xlu0 %1492
  %1494 = vrot.lane.b32.xlu0 %v942, 32
  %v1495 = vpop.permute.xlu0 %1494
  %v1499 = vsel %vm351, %v1233, 0
  %v1502 = vsel %vm351, %v1234, 0
  %1504 = vmatprep.subr.mxu0 0.0
  %1505 = vmatpush1.msra.mxu0 0.0
  %1506 = vmatprep.subr.mxu0 0.0
  %1507 = vmatpush1.msra.mxu0 0.0
  %1508 = vmatprep.subr.mxu0 0.0
  %1509 = vmatpush1.msra.mxu0 0.0
  %1510 = vmatprep.subr.mxu0 0.0
  %1511 = vmatpush1.msra.mxu0 0.0
  %1512 = vmatprep.subr.mxu0 0.0
  %1513 = vmatpush1.msra.mxu0 0.0
  %1514 = vmatprep.subr.mxu0 0.0
  %1515 = vmatpush1.msra.mxu0 0.0
  %1516 = vmatprep.subr.mxu0 0.0
  %1517 = vmatpush1.msra.mxu0 0.0
  %1518 = vmatprep.subr.mxu0 0.0
  %1519 = vmatpush1.msra.mxu0 0.0
  %1520 = vmatprep.subr.mxu0 0.0
  %1521 = vmatpush1.msra.mxu0 0.0
  %1522 = vmatprep.subr.mxu0 0.0
  %1523 = vmatpush1.msra.mxu0 0.0
  %1524 = vmatprep.subr.mxu0 0.0
  %1525 = vmatpush1.msra.mxu0 0.0
  %1526 = vmatprep.subr.mxu0 0.0
  %1527 = vmatpush1.msra.mxu0 0.0
  %1528 = vmatprep.subr.mxu0 0.0
  %1529 = vmatpush1.msra.mxu0 0.0
  %1530 = vmatprep.subr.mxu0 0.0
  %1531 = vmatpush1.msra.mxu0 0.0
  %1532 = vmatprep.subr.mxu0 0.0
  %1533 = vmatpush1.msra.mxu0 %v1495
  %1534 = vmatprep.subr.mxu0 0.0
  %1535 = vmatpush1.msra.mxu0 %v1493
  %1536 = vmatprep.subr.mxu0 0.0
  %1537 = vmatpush2.msra.mxu0 0.0
  %1538 = vmatprep.subr.mxu0 0.0
  %1539 = vmatpush2.msra.mxu0 0.0
  %1540 = vmatprep.subr.mxu0 0.0
  %1541 = vmatpush2.msra.mxu0 0.0
  %1542 = vmatprep.subr.mxu0 0.0
  %1543 = vmatpush2.msra.mxu0 0.0
  %1544 = vmatprep.subr.mxu0 0.0
  %1545 = vmatpush2.msra.mxu0 0.0
  %1546 = vmatprep.subr.mxu0 0.0
  %1547 = vmatpush2.msra.mxu0 0.0
  %1548 = vmatprep.subr.mxu0 0.0
  %1549 = vmatpush2.msra.mxu0 0.0
  %1550 = vmatprep.subr.mxu0 0.0
  %1551 = vmatpush2.msra.mxu0 0.0
  %1552 = vmatprep.subr.mxu0 0.0
  %1553 = vmatpush2.msra.mxu0 0.0
  %1554 = vmatprep.subr.mxu0 0.0
  %1555 = vmatpush2.msra.mxu0 0.0
  %1556 = vmatprep.subr.mxu0 0.0
  %1557 = vmatpush2.msra.mxu0 0.0
  %1558 = vmatprep.subr.mxu0 0.0
  %1559 = vmatpush2.msra.mxu0 0.0
  %1560 = vmatprep.subr.mxu0 0.0
  %1561 = vmatpush2.msra.mxu0 0.0
  %1562 = vmatprep.subr.mxu0 0.0
  %1563 = vmatpush2.msra.mxu0 0.0
  %1564 = vmatprep.subr.mxu0 0.0
  %1565 = vmatpush2.msra.mxu0 0.0
  %1566 = vmatprep.subr.mxu0 0.0
  %1567 = vmatpush2.msra.mxu0 0.0
  %1568 = vmatprep.mubr.f32.mxu0 0.0
  %1569 = vmatmul.mubr.f32.gmra.mxu0 %v1499
  %v1570 = vpop.f32.mrf.mxu0
  %v1571 = vadd.f32 0.0, %v1570
  %v1572 = vpop.f32.mrf.mxu0
  %1573 = vmatprep.mubr.f32.mxu0 0.0
  %1574 = vmatmul.mubr.f32.gmra.mxu0 %v1502
  %v1575 = vpop.f32.mrf.mxu0
  %v1576 = vadd.f32 0.0, %v1575
  %v1577 = vpop.f32.mrf.mxu0
  %1578 = vdwg.mxu0
  %1581 = vrot.lane.b32.xlu0 %v1397, 32
  %v1582 = vpop.permute.xlu0 %1581
  %1583 = vrot.lane.b32.xlu0 %v1402, 32
  %v1584 = vpop.permute.xlu0 %1583
  %1589 = vrot.lane.b32.xlu0 %v1484, 64
  %v1590 = vpop.permute.xlu0 %1589
  %1591 = vrot.lane.b32.xlu0 %v1489, 64
  %v1592 = vpop.permute.xlu0 %1591
  %1597 = vrot.lane.b32.xlu0 %v1571, 96
  %v1598 = vpop.permute.xlu0 %1597
  %1599 = vrot.lane.b32.xlu0 %v1576, 96
  %v1600 = vpop.permute.xlu0 %1599
  %v1603 = vsel %vm808, %v1308, %v1582
  %v1604 = vsel %vm808, %v1313, %v1584
  %v1605 = vsel %vm811, %v1603, %v1590
  %v1606 = vsel %vm811, %v1604, %v1592
  %v1607 = vsel %vm814, %v1605, %v1598
  %v1608 = vsel %vm814, %v1606, %v1600
  %v1609 = vld [vmem:[%s7] sm:$0x1]
  %v1611 = vlaneseq
  %v1612 = vshrl.u32 %v1611, 7
  %v1613 = vsub.s32 0, %v1612
  %v1614 = vrot.slane %v1609, %v1613
  %v1616 = vmul.f32 %v1607, %v1614
  %v1617 = vmul.f32 %v1608, %v1614
  %v1618 = vld [vmem:[%s8] sm:$0x1]
  %v1620 = vlaneseq
  %v1621 = vshrl.u32 %v1620, 7
  %v1622 = vsub.s32 0, %v1621
  %v1623 = vrot.slane %v1618, %v1622
  %v1625 = vadd.f32 %v1616, %v1623
  %v1626 = vadd.f32 %v1617, %v1623
  %v1627 = vmax.f32 %v1625, 0.0
  %v1628 = vmax.f32 %v1626, 0.0
  %v1629 = vld [vmem:[%s9] sm:$0xff]
  %v1630 = vld [vmem:[%s9 + $0x8] sm:$0xff]
  %v1631 = vld [vmem:[%s9 + $0x10] sm:$0xff]
  %v1632 = vld [vmem:[%s9 + $0x18] sm:$0xff]
  %v1633 = vld [vmem:[%s9 + $0x20] sm:$0xff]
  %v1634 = vld [vmem:[%s9 + $0x28] sm:$0xff]
  %v1635 = vld [vmem:[%s9 + $0x30] sm:$0xff]
  %v1636 = vld [vmem:[%s9 + $0x38] sm:$0xff]
  %v1637 = vld [vmem:[%s9 + $0x40] sm:$0xff]
  %v1638 = vld [vmem:[%s9 + $0x48] sm:$0xff]
  %v1639 = vld [vmem:[%s9 + $0x50] sm:$0xff]
  %v1640 = vld [vmem:[%s9 + $0x58] sm:$0xff]
  %v1641 = vld [vmem:[%s9 + $0x60] sm:$0xff]
  %v1642 = vld [vmem:[%s9 + $0x68] sm:$0xff]
  %v1643 = vld [vmem:[%s9 + $0x70] sm:$0xff]
  %v1644 = vld [vmem:[%s9 + $0x78] sm:$0xff]
  %v1645 = vld [vmem:[%s9 + $0x80] sm:$0xff]
  %v1646 = vld [vmem:[%s9 + $0x88] sm:$0xff]
  %v1647 = vld [vmem:[%s9 + $0x90] sm:$0xff]
  %v1648 = vld [vmem:[%s9 + $0x98] sm:$0xff]
  %v1649 = vld [vmem:[%s9 + $0xa0] sm:$0xff]
  %v1650 = vld [vmem:[%s9 + $0xa8] sm:$0xff]
  %v1651 = vld [vmem:[%s9 + $0xb0] sm:$0xff]
  %v1652 = vld [vmem:[%s9 + $0xb8] sm:$0xff]
  %v1653 = vld [vmem:[%s9 + $0xc0] sm:$0xff]
  %v1654 = vld [vmem:[%s9 + $0xc8] sm:$0xff]
  %v1655 = vld [vmem:[%s9 + $0xd0] sm:$0xff]
  %v1656 = vld [vmem:[%s9 + $0xd8] sm:$0xff]
  %v1657 = vld [vmem:[%s9 + $0xe0] sm:$0xff]
  %v1658 = vld [vmem:[%s9 + $0xe8] sm:$0xff]
  %v1659 = vld [vmem:[%s9 + $0xf0] sm:$0xff]
  %v1660 = vld [vmem:[%s9 + $0xf8] sm:$0xff]
  %1661 = vmatprep.subr.mxu0 %v1660
  %1662 = vmatpush1.msra.mxu0 %v1659
  %1663 = vmatprep.subr.mxu0 %v1658
  %1664 = vmatpush1.msra.mxu0 %v1657
  %1665 = vmatprep.subr.mxu0 %v1656
  %1666 = vmatpush1.msra.mxu0 %v1655
  %1667 = vmatprep.subr.mxu0 %v1654
  %1668 = vmatpush1.msra.mxu0 %v1653
  %1669 = vmatprep.subr.mxu0 %v1652
  %1670 = vmatpush1.msra.mxu0 %v1651
  %1671 = vmatprep.subr.mxu0 %v1650
  %1672 = vmatpush1.msra.mxu0 %v1649
  %1673 = vmatprep.subr.mxu0 %v1648
  %1674 = vmatpush1.msra.mxu0 %v1647
  %1675 = vmatprep.subr.mxu0 %v1646
  %1676 = vmatpush1.msra.mxu0 %v1645
  %1677 = vmatprep.subr.mxu0 %v1644
  %1678 = vmatpush1.msra.mxu0 %v1643
  %1679 = vmatprep.subr.mxu0 %v1642
  %1680 = vmatpush1.msra.mxu0 %v1641
  %1681 = vmatprep.subr.mxu0 %v1640
  %1682 = vmatpush1.msra.mxu0 %v1639
  %1683 = vmatprep.subr.mxu0 %v1638
  %1684 = vmatpush1.msra.mxu0 %v1637
  %1685 = vmatprep.subr.mxu0 %v1636
  %1686 = vmatpush1.msra.mxu0 %v1635
  %1687 = vmatprep.subr.mxu0 %v1634
  %1688 = vmatpush1.msra.mxu0 %v1633
  %1689 = vmatprep.subr.mxu0 %v1632
  %1690 = vmatpush1.msra.mxu0 %v1631
  %1691 = vmatprep.subr.mxu0 %v1630
  %1692 = vmatpush1.msra.mxu0 %v1629
  %1693 = vmatprep.subr.mxu0 0.0
  %1694 = vmatpush2.msra.mxu0 0.0
  %1695 = vmatprep.subr.mxu0 0.0
  %1696 = vmatpush2.msra.mxu0 0.0
  %1697 = vmatprep.subr.mxu0 0.0
  %1698 = vmatpush2.msra.mxu0 0.0
  %1699 = vmatprep.subr.mxu0 0.0
  %1700 = vmatpush2.msra.mxu0 0.0
  %1701 = vmatprep.subr.mxu0 0.0
  %1702 = vmatpush2.msra.mxu0 0.0
  %1703 = vmatprep.subr.mxu0 0.0
  %1704 = vmatpush2.msra.mxu0 0.0
  %1705 = vmatprep.subr.mxu0 0.0
  %1706 = vmatpush2.msra.mxu0 0.0
  %1707 = vmatprep.subr.mxu0 0.0
  %1708 = vmatpush2.msra.mxu0 0.0
  %1709 = vmatprep.subr.mxu0 0.0
  %1710 = vmatpush2.msra.mxu0 0.0
  %1711 = vmatprep.subr.mxu0 0.0
  %1712 = vmatpush2.msra.mxu0 0.0
  %1713 = vmatprep.subr.mxu0 0.0
  %1714 = vmatpush2.msra.mxu0 0.0
  %1715 = vmatprep.subr.mxu0 0.0
  %1716 = vmatpush2.msra.mxu0 0.0
  %1717 = vmatprep.subr.mxu0 0.0
  %1718 = vmatpush2.msra.mxu0 0.0
  %1719 = vmatprep.subr.mxu0 0.0
  %1720 = vmatpush2.msra.mxu0 0.0
  %1721 = vmatprep.subr.mxu0 0.0
  %1722 = vmatpush2.msra.mxu0 0.0
  %1723 = vmatprep.subr.mxu0 0.0
  %1724 = vmatpush2.msra.mxu0 0.0
  %1725 = vmatprep.mubr.f32.mxu0 0.0
  %1726 = vmatmul.mubr.f32.gmra.mxu0 %v1627
  %v1727 = vpop.f32.mrf.mxu0
  %v1728 = vadd.f32 0.0, %v1727
  %v1729 = vpop.f32.mrf.mxu0
  %v1730 = vadd.f32 0.0, %v1729
  %1731 = vmatprep.mubr.f32.mxu0 0.0
  %1732 = vmatmul.mubr.f32.gmra.mxu0 %v1628
  %v1733 = vpop.f32.mrf.mxu0
  %v1734 = vadd.f32 0.0, %v1733
  %v1735 = vpop.f32.mrf.mxu0
  %v1736 = vadd.f32 0.0, %v1735
  %1737 = vdwg.mxu0
  %1738 = vxpose.xlu0.b32.start [1/16] %v1730, 128
  %1739 = vxpose.xlu0.b32.cont [2/16] %v1736, 128
  %1740 = vxpose.xlu0.b32.cont [3/16] 0.0, 128
  %1741 = vxpose.xlu0.b32.cont [4/16] 0.0, 128
  %1742 = vxpose.xlu0.b32.cont [5/16] 0.0, 128
  %1743 = vxpose.xlu0.b32.cont [6/16] 0.0, 128
  %1744 = vxpose.xlu0.b32.cont [7/16] 0.0, 128
  %1745 = vxpose.xlu0.b32.cont [8/16] 0.0, 128
  %1746 = vxpose.xlu0.b32.cont [9/16] 0.0, 128
  %1747 = vxpose.xlu0.b32.cont [10/16] 0.0, 128
  %1748 = vxpose.xlu0.b32.cont [11/16] 0.0, 128
  %1749 = vxpose.xlu0.b32.cont [12/16] 0.0, 128
  %1750 = vxpose.xlu0.b32.cont [13/16] 0.0, 128
  %1751 = vxpose.xlu0.b32.cont [14/16] 0.0, 128
  %1752 = vxpose.xlu0.b32.cont [15/16] 0.0, 128
  %1753 = vxpose.xlu0.b32.end [16/16] 0.0, 128
  %v1754 = vpop.trf.xlu0
  %v1755 = vpop.trf.xlu0
  %v1756 = vpop.trf.xlu0
  %v1757 = vpop.trf.xlu0
  %v1758 = vpop.trf.xlu0
  %v1759 = vpop.trf.xlu0
  %v1760 = vpop.trf.xlu0
  %v1761 = vpop.trf.xlu0
  %v1762 = vpop.trf.xlu0
  %v1763 = vpop.trf.xlu0
  %v1764 = vpop.trf.xlu0
  %v1765 = vpop.trf.xlu0
  %v1766 = vpop.trf.xlu0
  %v1767 = vpop.trf.xlu0
  %v1768 = vpop.trf.xlu0
  %v1769 = vpop.trf.xlu0
  %1772 = vrot.lane.b32.xlu0 %v1730, 124
  %v1773 = vpop.permute.xlu0 %1772
  %1774 = vrot.lane.b32.xlu0 %v1736, 124
  %v1775 = vpop.permute.xlu0 %1774
  %1778 = vxpose.xlu0.b32.start [1/16] %v1773, 128
  %1779 = vxpose.xlu0.b32.cont [2/16] %v1775, 128
  %1780 = vxpose.xlu0.b32.cont [3/16] 0.0, 128
  %1781 = vxpose.xlu0.b32.cont [4/16] 0.0, 128
  %1782 = vxpose.xlu0.b32.cont [5/16] 0.0, 128
  %1783 = vxpose.xlu0.b32.cont [6/16] 0.0, 128
  %1784 = vxpose.xlu0.b32.cont [7/16] 0.0, 128
  %1785 = vxpose.xlu0.b32.cont [8/16] 0.0, 128
  %1786 = vxpose.xlu0.b32.cont [9/16] 0.0, 128
  %1787 = vxpose.xlu0.b32.cont [10/16] 0.0, 128
  %1788 = vxpose.xlu0.b32.cont [11/16] 0.0, 128
  %1789 = vxpose.xlu0.b32.cont [12/16] 0.0, 128
  %1790 = vxpose.xlu0.b32.cont [13/16] 0.0, 128
  %1791 = vxpose.xlu0.b32.cont [14/16] 0.0, 128
  %1792 = vxpose.xlu0.b32.cont [15/16] 0.0, 128
  %1793 = vxpose.xlu0.b32.end [16/16] 0.0, 128
  %v1794 = vpop.trf.xlu0
  %v1795 = vpop.trf.xlu0
  %v1796 = vpop.trf.xlu0
  %v1797 = vpop.trf.xlu0
  %v1798 = vpop.trf.xlu0
  %v1799 = vpop.trf.xlu0
  %v1800 = vpop.trf.xlu0
  %v1801 = vpop.trf.xlu0
  %v1802 = vpop.trf.xlu0
  %v1803 = vpop.trf.xlu0
  %v1804 = vpop.trf.xlu0
  %v1805 = vpop.trf.xlu0
  %v1806 = vpop.trf.xlu0
  %v1807 = vpop.trf.xlu0
  %v1808 = vpop.trf.xlu0
  %v1809 = vpop.trf.xlu0
  %v1810 = vlaneseq
  %v1811 = vshrl.u32 %v1810, 7
  %v1812 = vsub.s32 0, %v1811
  %v1813 = vrot.slane %v1794, %v1812
  %1815 = vbcast.lane.b32.xlu0 %v1813, 256
  %v1816 = vpop.permute.xlu0 %1815
  %s1818 = sor.u32 256, 8
  %1819 = vbcast.lane.b32.xlu0 %v1813, %s1818
  %v1820 = vpop.permute.xlu0 %1819
  %v1821 = vlaneseq
  %v1822 = vshrl.u32 %v1821, 7
  %v1823 = vsub.s32 1, %v1822
  %v1824 = vrot.slane %v1794, %v1823
  %1826 = vbcast.lane.b32.xlu0 %v1824, 256
  %v1827 = vpop.permute.xlu0 %1826
  %s1829 = sor.u32 256, 8
  %1830 = vbcast.lane.b32.xlu0 %v1824, %s1829
  %v1831 = vpop.permute.xlu0 %1830
  %v1832 = vlaneseq
  %v1833 = vshrl.u32 %v1832, 7
  %v1834 = vsub.s32 2, %v1833
  %v1835 = vrot.slane %v1794, %v1834
  %1837 = vbcast.lane.b32.xlu0 %v1835, 256
  %v1838 = vpop.permute.xlu0 %1837
  %s1840 = sor.u32 256, 8
  %1841 = vbcast.lane.b32.xlu0 %v1835, %s1840
  %v1842 = vpop.permute.xlu0 %1841
  %v1843 = vlaneseq
  %v1844 = vshrl.u32 %v1843, 7
  %v1845 = vsub.s32 3, %v1844
  %v1846 = vrot.slane %v1794, %v1845
  %1848 = vbcast.lane.b32.xlu0 %v1846, 256
  %v1849 = vpop.permute.xlu0 %1848
  %s1851 = sor.u32 256, 8
  %1852 = vbcast.lane.b32.xlu0 %v1846, %s1851
  %v1853 = vpop.permute.xlu0 %1852
  %v1856 = vunpack.c.l.s4 1966171168
  %v1857 = vunpack.c.0.s8 %v1856
  %v1858 = vlaneseq
  %v1859 = vshrl.u32 %v1858, 7
  %v1860 = vsub.s32 %v1857, %v1859
  %v1861 = vrot.slane %v1754, %v1860
  %v1862 = vcombine.high %v1861, %v1861
  %v1864 = vunpack.c.l.s4 1966171168
  %v1865 = vunpack.c.0.s8 %v1864
  %v1866 = vlaneseq
  %v1867 = vshrl.u32 %v1866, 7
  %v1868 = vsub.s32 %v1865, %v1867
  %v1869 = vrot.slane %v1861, %v1868
  %v1871 = vunpack.c.l.s4 1966171168
  %v1872 = vunpack.c.0.s8 %v1871
  %v1873 = vlaneseq
  %v1874 = vshrl.u32 %v1873, 7
  %v1875 = vsub.s32 %v1872, %v1874
  %v1876 = vrot.slane %v1862, %v1875
  %v1877 = vcombine.high %v1869, %v1869
  %v1878 = vcombine.high %v1876, %v1876
  %v1879 = vlaneseq
  %v1880 = vshrl.u32 %v1879, 7
  %v1881 = vsub.s32 0, %v1880
  %v1882 = vrot.slane %v1869, %v1881
  %v1883 = vlaneseq
  %v1884 = vshrl.u32 %v1883, 7
  %v1885 = vsub.s32 0, %v1884
  %v1886 = vrot.slane %v1876, %v1885
  %v1887 = vlaneseq
  %v1888 = vshrl.u32 %v1887, 7
  %v1889 = vsub.s32 0, %v1888
  %v1890 = vrot.slane %v1877, %v1889
  %v1891 = vlaneseq
  %v1892 = vshrl.u32 %v1891, 7
  %v1893 = vsub.s32 0, %v1892
  %v1894 = vrot.slane %v1878, %v1893
  %v1899 = vadd.f32 %v1816, %v1882
  %v1900 = vadd.f32 %v1820, %v1882
  %v1901 = vadd.f32 %v1827, %v1886
  %v1902 = vadd.f32 %v1831, %v1886
  %v1903 = vadd.f32 %v1838, %v1890
  %v1904 = vadd.f32 %v1842, %v1890
  %v1905 = vadd.f32 %v1849, %v1894
  %v1906 = vadd.f32 %v1853, %v1894
  %vm1907 = vcmp.gt.f32.partialorder %v1899, 0.0
  %vm1908 = vcmp.gt.f32.partialorder %v1900, 0.0
  %vm1909 = vcmp.gt.f32.partialorder %v1901, 0.0
  %vm1910 = vcmp.gt.f32.partialorder %v1902, 0.0
  %vm1911 = vcmp.gt.f32.partialorder %v1903, 0.0
  %vm1912 = vcmp.gt.f32.partialorder %v1904, 0.0
  %vm1913 = vcmp.gt.f32.partialorder %v1905, 0.0
  %vm1914 = vcmp.gt.f32.partialorder %v1906, 0.0
  %v1915 = vmul.f32 %v1899, 0.2
  %v1916 = vmul.f32 %v1900, 0.2
  %v1917 = vmul.f32 %v1901, 0.2
  %v1918 = vmul.f32 %v1902, 0.2
  %v1919 = vmul.f32 %v1903, 0.2
  %v1920 = vmul.f32 %v1904, 0.2
  %v1921 = vmul.f32 %v1905, 0.2
  %v1922 = vmul.f32 %v1906, 0.2
  %v1923 = vsel %vm1907, %v1899, %v1915
  %v1924 = vsel %vm1908, %v1900, %v1916
  %v1925 = vsel %vm1909, %v1901, %v1917
  %v1926 = vsel %vm1910, %v1902, %v1918
  %v1927 = vsel %vm1911, %v1903, %v1919
  %v1928 = vsel %vm1912, %v1904, %v1920
  %v1929 = vsel %vm1913, %v1905, %v1921
  %v1930 = vsel %vm1914, %v1906, %v1922
  %v1931 = vadd.f32 %v1923, %v60
  %v1932 = vadd.f32 %v1924, %v61
  %v1933 = vadd.f32 %v1925, %v60
  %v1934 = vadd.f32 %v1926, %v61
  %v1935 = vadd.f32 %v1927, %v60
  %v1936 = vadd.f32 %v1928, %v61
  %v1937 = vadd.f32 %v1929, %v60
  %v1938 = vadd.f32 %v1930, %v61
  %v1939 = vsel %vm351, %v1931, -inf
  %1940 = vmax.xlane.f32.xlu0 %v1939
  %v1941 = vpop.xlane.xlu0 %1940
  %v1942 = vsel %vm351, %v1932, -inf
  %1943 = vmax.xlane.f32.xlu0 %v1942
  %v1944 = vpop.xlane.xlu0 %1943
  %v1945 = vsel %vm351, %v1933, -inf
  %1946 = vmax.xlane.f32.xlu0 %v1945
  %v1947 = vpop.xlane.xlu0 %1946
  %v1948 = vsel %vm351, %v1934, -inf
  %1949 = vmax.xlane.f32.xlu0 %v1948
  %v1950 = vpop.xlane.xlu0 %1949
  %v1951 = vsel %vm351, %v1935, -inf
  %1952 = vmax.xlane.f32.xlu0 %v1951
  %v1953 = vpop.xlane.xlu0 %1952
  %v1954 = vsel %vm351, %v1936, -inf
  %1955 = vmax.xlane.f32.xlu0 %v1954
  %v1956 = vpop.xlane.xlu0 %1955
  %v1957 = vsel %vm351, %v1937, -inf
  %1958 = vmax.xlane.f32.xlu0 %v1957
  %v1959 = vpop.xlane.xlu0 %1958
  %v1960 = vsel %vm351, %v1938, -inf
  %1961 = vmax.xlane.f32.xlu0 %v1960
  %v1962 = vpop.xlane.xlu0 %1961
  %v1963 = vsub.f32 %v1931, %v1941
  %v1964 = vsub.f32 %v1932, %v1944
  %v1965 = vsub.f32 %v1933, %v1947
  %v1966 = vsub.f32 %v1934, %v1950
  %v1967 = vsub.f32 %v1935, %v1953
  %v1968 = vsub.f32 %v1936, %v1956
  %v1969 = vsub.f32 %v1937, %v1959
  %v1970 = vsub.f32 %v1938, %v1962
  %v1971 = vmul.f32 %v1963, 1.442695
  %v1972 = vpow.pop %v1971
  %v1973 = vmul.f32 %v1964, 1.442695
  %v1974 = vpow.pop %v1973
  %v1975 = vmul.f32 %v1965, 1.442695
  %v1976 = vpow.pop %v1975
  %v1977 = vmul.f32 %v1966, 1.442695
  %v1978 = vpow.pop %v1977
  %v1979 = vmul.f32 %v1967, 1.442695
  %v1980 = vpow.pop %v1979
  %v1981 = vmul.f32 %v1968, 1.442695
  %v1982 = vpow.pop %v1981
  %v1983 = vmul.f32 %v1969, 1.442695
  %v1984 = vpow.pop %v1983
  %v1985 = vmul.f32 %v1970, 1.442695
  %v1986 = vpow.pop %v1985
  %v1987 = vsel %vm351, %v1972, 0.0
  %1988 = vadd.xlane.f32.xlu0 %v1987
  %v1989 = vpop.xlane.xlu0 %1988
  %v1990 = vsel %vm351, %v1974, 0.0
  %1991 = vadd.xlane.f32.xlu0 %v1990
  %v1992 = vpop.xlane.xlu0 %1991
  %v1993 = vsel %vm351, %v1976, 0.0
  %1994 = vadd.xlane.f32.xlu0 %v1993
  %v1995 = vpop.xlane.xlu0 %1994
  %v1996 = vsel %vm351, %v1978, 0.0
  %1997 = vadd.xlane.f32.xlu0 %v1996
  %v1998 = vpop.xlane.xlu0 %1997
  %v1999 = vsel %vm351, %v1980, 0.0
  %2000 = vadd.xlane.f32.xlu0 %v1999
  %v2001 = vpop.xlane.xlu0 %2000
  %v2002 = vsel %vm351, %v1982, 0.0
  %2003 = vadd.xlane.f32.xlu0 %v2002
  %v2004 = vpop.xlane.xlu0 %2003
  %v2005 = vsel %vm351, %v1984, 0.0
  %2006 = vadd.xlane.f32.xlu0 %v2005
  %v2007 = vpop.xlane.xlu0 %2006
  %v2008 = vsel %vm351, %v1986, 0.0
  %2009 = vadd.xlane.f32.xlu0 %v2008
  %v2010 = vpop.xlane.xlu0 %2009
  %v2011 = vrcp.pop %v1989
  %v2012 = vrcp.pop %v1992
  %v2013 = vrcp.pop %v1995
  %v2014 = vrcp.pop %v1998
  %v2015 = vrcp.pop %v2001
  %v2016 = vrcp.pop %v2004
  %v2017 = vrcp.pop %v2007
  %v2018 = vrcp.pop %v2010
  %v2019 = vmul.f32 %v1972, %v2011
  %v2020 = vmul.f32 %v1974, %v2012
  %v2021 = vmul.f32 %v1976, %v2013
  %v2022 = vmul.f32 %v1978, %v2014
  %v2023 = vmul.f32 %v1980, %v2015
  %v2024 = vmul.f32 %v1982, %v2016
  %v2025 = vmul.f32 %v1984, %v2017
  %v2026 = vmul.f32 %v1986, %v2018
  %2029 = vrot.lane.b32.xlu0 %v1728, 96
  %v2030 = vpop.permute.xlu0 %2029
  %2031 = vrot.lane.b32.xlu0 %v1734, 96
  %v2032 = vpop.permute.xlu0 %2031
  %v2036 = vsel %vm351, %v2021, 0
  %v2039 = vsel %vm351, %v2022, 0
  %2041 = vmatprep.subr.mxu0 0.0
  %2042 = vmatpush1.msra.mxu0 0.0
  %2043 = vmatprep.subr.mxu0 0.0
  %2044 = vmatpush1.msra.mxu0 0.0
  %2045 = vmatprep.subr.mxu0 0.0
  %2046 = vmatpush1.msra.mxu0 0.0
  %2047 = vmatprep.subr.mxu0 0.0
  %2048 = vmatpush1.msra.mxu0 0.0
  %2049 = vmatprep.subr.mxu0 0.0
  %2050 = vmatpush1.msra.mxu0 0.0
  %2051 = vmatprep.subr.mxu0 0.0
  %2052 = vmatpush1.msra.mxu0 0.0
  %2053 = vmatprep.subr.mxu0 0.0
  %2054 = vmatpush1.msra.mxu0 0.0
  %2055 = vmatprep.subr.mxu0 0.0
  %2056 = vmatpush1.msra.mxu0 0.0
  %2057 = vmatprep.subr.mxu0 0.0
  %2058 = vmatpush1.msra.mxu0 0.0
  %2059 = vmatprep.subr.mxu0 0.0
  %2060 = vmatpush1.msra.mxu0 0.0
  %2061 = vmatprep.subr.mxu0 0.0
  %2062 = vmatpush1.msra.mxu0 0.0
  %2063 = vmatprep.subr.mxu0 0.0
  %2064 = vmatpush1.msra.mxu0 0.0
  %2065 = vmatprep.subr.mxu0 0.0
  %2066 = vmatpush1.msra.mxu0 0.0
  %2067 = vmatprep.subr.mxu0 0.0
  %2068 = vmatpush1.msra.mxu0 0.0
  %2069 = vmatprep.subr.mxu0 0.0
  %2070 = vmatpush1.msra.mxu0 %v2032
  %2071 = vmatprep.subr.mxu0 0.0
  %2072 = vmatpush1.msra.mxu0 %v2030
  %2073 = vmatprep.subr.mxu0 0.0
  %2074 = vmatpush2.msra.mxu0 0.0
  %2075 = vmatprep.subr.mxu0 0.0
  %2076 = vmatpush2.msra.mxu0 0.0
  %2077 = vmatprep.subr.mxu0 0.0
  %2078 = vmatpush2.msra.mxu0 0.0
  %2079 = vmatprep.subr.mxu0 0.0
  %2080 = vmatpush2.msra.mxu0 0.0
  %2081 = vmatprep.subr.mxu0 0.0
  %2082 = vmatpush2.msra.mxu0 0.0
  %2083 = vmatprep.subr.mxu0 0.0
  %2084 = vmatpush2.msra.mxu0 0.0
  %2085 = vmatprep.subr.mxu0 0.0
  %2086 = vmatpush2.msra.mxu0 0.0
  %2087 = vmatprep.subr.mxu0 0.0
  %2088 = vmatpush2.msra.mxu0 0.0
  %2089 = vmatprep.subr.mxu0 0.0
  %2090 = vmatpush2.msra.mxu0 0.0
  %2091 = vmatprep.subr.mxu0 0.0
  %2092 = vmatpush2.msra.mxu0 0.0
  %2093 = vmatprep.subr.mxu0 0.0
  %2094 = vmatpush2.msra.mxu0 0.0
  %2095 = vmatprep.subr.mxu0 0.0
  %2096 = vmatpush2.msra.mxu0 0.0
  %2097 = vmatprep.subr.mxu0 0.0
  %2098 = vmatpush2.msra.mxu0 0.0
  %2099 = vmatprep.subr.mxu0 0.0
  %2100 = vmatpush2.msra.mxu0 0.0
  %2101 = vmatprep.subr.mxu0 0.0
  %2102 = vmatpush2.msra.mxu0 0.0
  %2103 = vmatprep.subr.mxu0 0.0
  %2104 = vmatpush2.msra.mxu0 0.0
  %2105 = vmatprep.mubr.f32.mxu0 0.0
  %2106 = vmatmul.mubr.f32.gmra.mxu0 %v2036
  %v2107 = vpop.f32.mrf.mxu0
  %v2108 = vadd.f32 0.0, %v2107
  %v2109 = vpop.f32.mrf.mxu0
  %2110 = vmatprep.mubr.f32.mxu0 0.0
  %2111 = vmatmul.mubr.f32.gmra.mxu0 %v2039
  %v2112 = vpop.f32.mrf.mxu0
  %v2113 = vadd.f32 0.0, %v2112
  %v2114 = vpop.f32.mrf.mxu0
  %2115 = vdwg.mxu0
  %2116 = vrot.lane.b32.xlu0 %v1728, 64
  %v2117 = vpop.permute.xlu0 %2116
  %2118 = vrot.lane.b32.xlu0 %v1734, 64
  %v2119 = vpop.permute.xlu0 %2118
  %v2123 = vsel %vm351, %v2023, 0
  %v2126 = vsel %vm351, %v2024, 0
  %2128 = vmatprep.subr.mxu0 0.0
  %2129 = vmatpush1.msra.mxu0 0.0
  %2130 = vmatprep.subr.mxu0 0.0
  %2131 = vmatpush1.msra.mxu0 0.0
  %2132 = vmatprep.subr.mxu0 0.0
  %2133 = vmatpush1.msra.mxu0 0.0
  %2134 = vmatprep.subr.mxu0 0.0
  %2135 = vmatpush1.msra.mxu0 0.0
  %2136 = vmatprep.subr.mxu0 0.0
  %2137 = vmatpush1.msra.mxu0 0.0
  %2138 = vmatprep.subr.mxu0 0.0
  %2139 = vmatpush1.msra.mxu0 0.0
  %2140 = vmatprep.subr.mxu0 0.0
  %2141 = vmatpush1.msra.mxu0 0.0
  %2142 = vmatprep.subr.mxu0 0.0
  %2143 = vmatpush1.msra.mxu0 0.0
  %2144 = vmatprep.subr.mxu0 0.0
  %2145 = vmatpush1.msra.mxu0 0.0
  %2146 = vmatprep.subr.mxu0 0.0
  %2147 = vmatpush1.msra.mxu0 0.0
  %2148 = vmatprep.subr.mxu0 0.0
  %2149 = vmatpush1.msra.mxu0 0.0
  %2150 = vmatprep.subr.mxu0 0.0
  %2151 = vmatpush1.msra.mxu0 0.0
  %2152 = vmatprep.subr.mxu0 0.0
  %2153 = vmatpush1.msra.mxu0 0.0
  %2154 = vmatprep.subr.mxu0 0.0
  %2155 = vmatpush1.msra.mxu0 0.0
  %2156 = vmatprep.subr.mxu0 0.0
  %2157 = vmatpush1.msra.mxu0 %v2119
  %2158 = vmatprep.subr.mxu0 0.0
  %2159 = vmatpush1.msra.mxu0 %v2117
  %2160 = vmatprep.subr.mxu0 0.0
  %2161 = vmatpush2.msra.mxu0 0.0
  %2162 = vmatprep.subr.mxu0 0.0
  %2163 = vmatpush2.msra.mxu0 0.0
  %2164 = vmatprep.subr.mxu0 0.0
  %2165 = vmatpush2.msra.mxu0 0.0
  %2166 = vmatprep.subr.mxu0 0.0
  %2167 = vmatpush2.msra.mxu0 0.0
  %2168 = vmatprep.subr.mxu0 0.0
  %2169 = vmatpush2.msra.mxu0 0.0
  %2170 = vmatprep.subr.mxu0 0.0
  %2171 = vmatpush2.msra.mxu0 0.0
  %2172 = vmatprep.subr.mxu0 0.0
  %2173 = vmatpush2.msra.mxu0 0.0
  %2174 = vmatprep.subr.mxu0 0.0
  %2175 = vmatpush2.msra.mxu0 0.0
  %2176 = vmatprep.subr.mxu0 0.0
  %2177 = vmatpush2.msra.mxu0 0.0
  %2178 = vmatprep.subr.mxu0 0.0
  %2179 = vmatpush2.msra.mxu0 0.0
  %2180 = vmatprep.subr.mxu0 0.0
  %2181 = vmatpush2.msra.mxu0 0.0
  %2182 = vmatprep.subr.mxu0 0.0
  %2183 = vmatpush2.msra.mxu0 0.0
  %2184 = vmatprep.subr.mxu0 0.0
  %2185 = vmatpush2.msra.mxu0 0.0
  %2186 = vmatprep.subr.mxu0 0.0
  %2187 = vmatpush2.msra.mxu0 0.0
  %2188 = vmatprep.subr.mxu0 0.0
  %2189 = vmatpush2.msra.mxu0 0.0
  %2190 = vmatprep.subr.mxu0 0.0
  %2191 = vmatpush2.msra.mxu0 0.0
  %2192 = vmatprep.mubr.f32.mxu0 0.0
  %2193 = vmatmul.mubr.f32.gmra.mxu0 %v2123
  %v2194 = vpop.f32.mrf.mxu0
  %v2195 = vadd.f32 0.0, %v2194
  %v2196 = vpop.f32.mrf.mxu0
  %2197 = vmatprep.mubr.f32.mxu0 0.0
  %2198 = vmatmul.mubr.f32.gmra.mxu0 %v2126
  %v2199 = vpop.f32.mrf.mxu0
  %v2200 = vadd.f32 0.0, %v2199
  %v2201 = vpop.f32.mrf.mxu0
  %2202 = vdwg.mxu0
  %2203 = vrot.lane.b32.xlu0 %v1728, 32
  %v2204 = vpop.permute.xlu0 %2203
  %2205 = vrot.lane.b32.xlu0 %v1734, 32
  %v2206 = vpop.permute.xlu0 %2205
  %v2210 = vsel %vm351, %v2025, 0
  %v2213 = vsel %vm351, %v2026, 0
  %2215 = vmatprep.subr.mxu0 0.0
  %2216 = vmatpush1.msra.mxu0 0.0
  %2217 = vmatprep.subr.mxu0 0.0
  %2218 = vmatpush1.msra.mxu0 0.0
  %2219 = vmatprep.subr.mxu0 0.0
  %2220 = vmatpush1.msra.mxu0 0.0
  %2221 = vmatprep.subr.mxu0 0.0
  %2222 = vmatpush1.msra.mxu0 0.0
  %2223 = vmatprep.subr.mxu0 0.0
  %2224 = vmatpush1.msra.mxu0 0.0
  %2225 = vmatprep.subr.mxu0 0.0
  %2226 = vmatpush1.msra.mxu0 0.0
  %2227 = vmatprep.subr.mxu0 0.0
  %2228 = vmatpush1.msra.mxu0 0.0
  %2229 = vmatprep.subr.mxu0 0.0
  %2230 = vmatpush1.msra.mxu0 0.0
  %2231 = vmatprep.subr.mxu0 0.0
  %2232 = vmatpush1.msra.mxu0 0.0
  %2233 = vmatprep.subr.mxu0 0.0
  %2234 = vmatpush1.msra.mxu0 0.0
  %2235 = vmatprep.subr.mxu0 0.0
  %2236 = vmatpush1.msra.mxu0 0.0
  %2237 = vmatprep.subr.mxu0 0.0
  %2238 = vmatpush1.msra.mxu0 0.0
  %2239 = vmatprep.subr.mxu0 0.0
  %2240 = vmatpush1.msra.mxu0 0.0
  %2241 = vmatprep.subr.mxu0 0.0
  %2242 = vmatpush1.msra.mxu0 0.0
  %2243 = vmatprep.subr.mxu0 0.0
  %2244 = vmatpush1.msra.mxu0 %v2206
  %2245 = vmatprep.subr.mxu0 0.0
  %2246 = vmatpush1.msra.mxu0 %v2204
  %2247 = vmatprep.subr.mxu0 0.0
  %2248 = vmatpush2.msra.mxu0 0.0
  %2249 = vmatprep.subr.mxu0 0.0
  %2250 = vmatpush2.msra.mxu0 0.0
  %2251 = vmatprep.subr.mxu0 0.0
  %2252 = vmatpush2.msra.mxu0 0.0
  %2253 = vmatprep.subr.mxu0 0.0
  %2254 = vmatpush2.msra.mxu0 0.0
  %2255 = vmatprep.subr.mxu0 0.0
  %2256 = vmatpush2.msra.mxu0 0.0
  %2257 = vmatprep.subr.mxu0 0.0
  %2258 = vmatpush2.msra.mxu0 0.0
  %2259 = vmatprep.subr.mxu0 0.0
  %2260 = vmatpush2.msra.mxu0 0.0
  %2261 = vmatprep.subr.mxu0 0.0
  %2262 = vmatpush2.msra.mxu0 0.0
  %2263 = vmatprep.subr.mxu0 0.0
  %2264 = vmatpush2.msra.mxu0 0.0
  %2265 = vmatprep.subr.mxu0 0.0
  %2266 = vmatpush2.msra.mxu0 0.0
  %2267 = vmatprep.subr.mxu0 0.0
  %2268 = vmatpush2.msra.mxu0 0.0
  %2269 = vmatprep.subr.mxu0 0.0
  %2270 = vmatpush2.msra.mxu0 0.0
  %2271 = vmatprep.subr.mxu0 0.0
  %2272 = vmatpush2.msra.mxu0 0.0
  %2273 = vmatprep.subr.mxu0 0.0
  %2274 = vmatpush2.msra.mxu0 0.0
  %2275 = vmatprep.subr.mxu0 0.0
  %2276 = vmatpush2.msra.mxu0 0.0
  %2277 = vmatprep.subr.mxu0 0.0
  %2278 = vmatpush2.msra.mxu0 0.0
  %2279 = vmatprep.mubr.f32.mxu0 0.0
  %2280 = vmatmul.mubr.f32.gmra.mxu0 %v2210
  %v2281 = vpop.f32.mrf.mxu0
  %v2282 = vadd.f32 0.0, %v2281
  %v2283 = vpop.f32.mrf.mxu0
  %2284 = vmatprep.mubr.f32.mxu0 0.0
  %2285 = vmatmul.mubr.f32.gmra.mxu0 %v2213
  %v2286 = vpop.f32.mrf.mxu0
  %v2287 = vadd.f32 0.0, %v2286
  %v2288 = vpop.f32.mrf.mxu0
  %2289 = vdwg.mxu0
  %v2291 = vsel %vm351, %v2019, 0
  %v2294 = vsel %vm351, %v2020, 0
  %2296 = vmatprep.subr.mxu0 0.0
  %2297 = vmatpush1.msra.mxu0 0.0
  %2298 = vmatprep.subr.mxu0 0.0
  %2299 = vmatpush1.msra.mxu0 0.0
  %2300 = vmatprep.subr.mxu0 0.0
  %2301 = vmatpush1.msra.mxu0 0.0
  %2302 = vmatprep.subr.mxu0 0.0
  %2303 = vmatpush1.msra.mxu0 0.0
  %2304 = vmatprep.subr.mxu0 0.0
  %2305 = vmatpush1.msra.mxu0 0.0
  %2306 = vmatprep.subr.mxu0 0.0
  %2307 = vmatpush1.msra.mxu0 0.0
  %2308 = vmatprep.subr.mxu0 0.0
  %2309 = vmatpush1.msra.mxu0 0.0
  %2310 = vmatprep.subr.mxu0 0.0
  %2311 = vmatpush1.msra.mxu0 0.0
  %2312 = vmatprep.subr.mxu0 0.0
  %2313 = vmatpush1.msra.mxu0 0.0
  %2314 = vmatprep.subr.mxu0 0.0
  %2315 = vmatpush1.msra.mxu0 0.0
  %2316 = vmatprep.subr.mxu0 0.0
  %2317 = vmatpush1.msra.mxu0 0.0
  %2318 = vmatprep.subr.mxu0 0.0
  %2319 = vmatpush1.msra.mxu0 0.0
  %2320 = vmatprep.subr.mxu0 0.0
  %2321 = vmatpush1.msra.mxu0 0.0
  %2322 = vmatprep.subr.mxu0 0.0
  %2323 = vmatpush1.msra.mxu0 0.0
  %2324 = vmatprep.subr.mxu0 0.0
  %2325 = vmatpush1.msra.mxu0 %v1734
  %2326 = vmatprep.subr.mxu0 0.0
  %2327 = vmatpush1.msra.mxu0 %v1728
  %2328 = vmatprep.subr.mxu0 0.0
  %2329 = vmatpush2.msra.mxu0 0.0
  %2330 = vmatprep.subr.mxu0 0.0
  %2331 = vmatpush2.msra.mxu0 0.0
  %2332 = vmatprep.subr.mxu0 0.0
  %2333 = vmatpush2.msra.mxu0 0.0
  %2334 = vmatprep.subr.mxu0 0.0
  %2335 = vmatpush2.msra.mxu0 0.0
  %2336 = vmatprep.subr.mxu0 0.0
  %2337 = vmatpush2.msra.mxu0 0.0
  %2338 = vmatprep.subr.mxu0 0.0
  %2339 = vmatpush2.msra.mxu0 0.0
  %2340 = vmatprep.subr.mxu0 0.0
  %2341 = vmatpush2.msra.mxu0 0.0
  %2342 = vmatprep.subr.mxu0 0.0
  %2343 = vmatpush2.msra.mxu0 0.0
  %2344 = vmatprep.subr.mxu0 0.0
  %2345 = vmatpush2.msra.mxu0 0.0
  %2346 = vmatprep.subr.mxu0 0.0
  %2347 = vmatpush2.msra.mxu0 0.0
  %2348 = vmatprep.subr.mxu0 0.0
  %2349 = vmatpush2.msra.mxu0 0.0
  %2350 = vmatprep.subr.mxu0 0.0
  %2351 = vmatpush2.msra.mxu0 0.0
  %2352 = vmatprep.subr.mxu0 0.0
  %2353 = vmatpush2.msra.mxu0 0.0
  %2354 = vmatprep.subr.mxu0 0.0
  %2355 = vmatpush2.msra.mxu0 0.0
  %2356 = vmatprep.subr.mxu0 0.0
  %2357 = vmatpush2.msra.mxu0 0.0
  %2358 = vmatprep.subr.mxu0 0.0
  %2359 = vmatpush2.msra.mxu0 0.0
  %2360 = vmatprep.mubr.f32.mxu0 0.0
  %2361 = vmatmul.mubr.f32.gmra.mxu0 %v2291
  %v2362 = vpop.f32.mrf.mxu0
  %v2363 = vadd.f32 %v2108, %v2362
  %v2364 = vpop.f32.mrf.mxu0
  %2365 = vmatprep.mubr.f32.mxu0 0.0
  %2366 = vmatmul.mubr.f32.gmra.mxu0 %v2294
  %v2367 = vpop.f32.mrf.mxu0
  %v2368 = vadd.f32 %v2113, %v2367
  %v2369 = vpop.f32.mrf.mxu0
  %2370 = vdwg.mxu0
  %v2371 = vadd.f32 %v2363, %v2195
  %v2372 = vadd.f32 %v2368, %v2200
  %v2373 = vadd.f32 %v2371, %v2282
  %v2374 = vadd.f32 %v2372, %v2287
  %v2375 = vmul.f32 %v2373, 0.25
  %v2376 = vmul.f32 %v2374, 0.25
  %v2377 = vld [vmem:[%s10] sm:$0x1]
  %v2379 = vlaneseq
  %v2380 = vshrl.u32 %v2379, 7
  %v2381 = vsub.s32 0, %v2380
  %v2382 = vrot.slane %v2377, %v2381
  %v2384 = vadd.f32 %v2375, %v2382
  %v2385 = vadd.f32 %v2376, %v2382
  %v2386 = vmax.f32 %v2384, 0.0
  %v2387 = vmax.f32 %v2385, 0.0
  %v2388 = vld [vmem:[%s2] sm:$0x3]
  %v2390 = vsel %vm351, %v2388, 0
  %2392 = vmatprep.subr.mxu0 0.0
  %2393 = vmatpush1.msra.mxu0 0.0
  %2394 = vmatprep.subr.mxu0 0.0
  %2395 = vmatpush1.msra.mxu0 0.0
  %2396 = vmatprep.subr.mxu0 0.0
  %2397 = vmatpush1.msra.mxu0 0.0
  %2398 = vmatprep.subr.mxu0 0.0
  %2399 = vmatpush1.msra.mxu0 0.0
  %2400 = vmatprep.subr.mxu0 0.0
  %2401 = vmatpush1.msra.mxu0 0.0
  %2402 = vmatprep.subr.mxu0 0.0
  %2403 = vmatpush1.msra.mxu0 0.0
  %2404 = vmatprep.subr.mxu0 0.0
  %2405 = vmatpush1.msra.mxu0 0.0
  %2406 = vmatprep.subr.mxu0 0.0
  %2407 = vmatpush1.msra.mxu0 0.0
  %2408 = vmatprep.subr.mxu0 0.0
  %2409 = vmatpush1.msra.mxu0 0.0
  %2410 = vmatprep.subr.mxu0 0.0
  %2411 = vmatpush1.msra.mxu0 0.0
  %2412 = vmatprep.subr.mxu0 0.0
  %2413 = vmatpush1.msra.mxu0 0.0
  %2414 = vmatprep.subr.mxu0 0.0
  %2415 = vmatpush1.msra.mxu0 0.0
  %2416 = vmatprep.subr.mxu0 0.0
  %2417 = vmatpush1.msra.mxu0 0.0
  %2418 = vmatprep.subr.mxu0 0.0
  %2419 = vmatpush1.msra.mxu0 0.0
  %2420 = vmatprep.subr.mxu0 0.0
  %2421 = vmatpush1.msra.mxu0 %v2387
  %2422 = vmatprep.subr.mxu0 0.0
  %2423 = vmatpush1.msra.mxu0 %v2386
  %2424 = vmatprep.subr.mxu0 0.0
  %2425 = vmatpush2.msra.mxu0 0.0
  %2426 = vmatprep.subr.mxu0 0.0
  %2427 = vmatpush2.msra.mxu0 0.0
  %2428 = vmatprep.subr.mxu0 0.0
  %2429 = vmatpush2.msra.mxu0 0.0
  %2430 = vmatprep.subr.mxu0 0.0
  %2431 = vmatpush2.msra.mxu0 0.0
  %2432 = vmatprep.subr.mxu0 0.0
  %2433 = vmatpush2.msra.mxu0 0.0
  %2434 = vmatprep.subr.mxu0 0.0
  %2435 = vmatpush2.msra.mxu0 0.0
  %2436 = vmatprep.subr.mxu0 0.0
  %2437 = vmatpush2.msra.mxu0 0.0
  %2438 = vmatprep.subr.mxu0 0.0
  %2439 = vmatpush2.msra.mxu0 0.0
  %2440 = vmatprep.subr.mxu0 0.0
  %2441 = vmatpush2.msra.mxu0 0.0
  %2442 = vmatprep.subr.mxu0 0.0
  %2443 = vmatpush2.msra.mxu0 0.0
  %2444 = vmatprep.subr.mxu0 0.0
  %2445 = vmatpush2.msra.mxu0 0.0
  %2446 = vmatprep.subr.mxu0 0.0
  %2447 = vmatpush2.msra.mxu0 0.0
  %2448 = vmatprep.subr.mxu0 0.0
  %2449 = vmatpush2.msra.mxu0 0.0
  %2450 = vmatprep.subr.mxu0 0.0
  %2451 = vmatpush2.msra.mxu0 0.0
  %2452 = vmatprep.subr.mxu0 0.0
  %2453 = vmatpush2.msra.mxu0 0.0
  %2454 = vmatprep.subr.mxu0 0.0
  %2455 = vmatpush2.msra.mxu0 0.0
  %2456 = vmatprep.mubr.f32.mxu0 0.0
  %2457 = vmatmul.mubr.f32.gmra.mxu0 %v2390
  %v2458 = vpop.f32.mrf.mxu0
  %v2459 = vadd.f32 0.0, %v2458
  %v2460 = vpop.f32.mrf.mxu0
  %2461 = vdwg.mxu0
  %v2462 = vld [vmem:[%s11] sm:$0xff]
  %v2463 = vld [vmem:[%s11 + $0x8] sm:$0xff]
  %v2464 = vld [vmem:[%s11 + $0x10] sm:$0xff]
  %v2465 = vld [vmem:[%s11 + $0x18] sm:$0xff]
  %v2466 = vld [vmem:[%s11 + $0x20] sm:$0xff]
  %v2467 = vld [vmem:[%s11 + $0x28] sm:$0xff]
  %v2468 = vld [vmem:[%s11 + $0x30] sm:$0xff]
  %v2469 = vld [vmem:[%s11 + $0x38] sm:$0xff]
  %v2470 = vld [vmem:[%s12] sm:$0x3]
  %v2472 = vlaneseq
  %v2473 = vshrl.u32 %v2472, 7
  %v2474 = vsub.s32 0, %v2473
  %v2475 = vrot.slane %v2470, %v2474
  %v2476 = vlaneseq
  %v2477 = vshrl.u32 %v2476, 7
  %v2478 = vsub.s32 1, %v2477
  %v2479 = vrot.slane %v2470, %v2478
  %v2483 = vsel %vm808, %v2459, 0
  %2485 = vmatprep.subr.mxu0 0.0
  %2486 = vmatpush1.msra.mxu0 0.0
  %2487 = vmatprep.subr.mxu0 0.0
  %2488 = vmatpush1.msra.mxu0 0.0
  %2489 = vmatprep.subr.mxu0 0.0
  %2490 = vmatpush1.msra.mxu0 0.0
  %2491 = vmatprep.subr.mxu0 0.0
  %2492 = vmatpush1.msra.mxu0 0.0
  %2493 = vmatprep.subr.mxu0 0.0
  %2494 = vmatpush1.msra.mxu0 0.0
  %2495 = vmatprep.subr.mxu0 0.0
  %2496 = vmatpush1.msra.mxu0 0.0
  %2497 = vmatprep.subr.mxu0 0.0
  %2498 = vmatpush1.msra.mxu0 0.0
  %2499 = vmatprep.subr.mxu0 0.0
  %2500 = vmatpush1.msra.mxu0 0.0
  %2501 = vmatprep.subr.mxu0 0.0
  %2502 = vmatpush1.msra.mxu0 0.0
  %2503 = vmatprep.subr.mxu0 0.0
  %2504 = vmatpush1.msra.mxu0 0.0
  %2505 = vmatprep.subr.mxu0 0.0
  %2506 = vmatpush1.msra.mxu0 0.0
  %2507 = vmatprep.subr.mxu0 0.0
  %2508 = vmatpush1.msra.mxu0 0.0
  %2509 = vmatprep.subr.mxu0 %v2469
  %2510 = vmatpush1.msra.mxu0 %v2468
  %2511 = vmatprep.subr.mxu0 %v2467
  %2512 = vmatpush1.msra.mxu0 %v2466
  %2513 = vmatprep.subr.mxu0 %v2465
  %2514 = vmatpush1.msra.mxu0 %v2464
  %2515 = vmatprep.subr.mxu0 %v2463
  %2516 = vmatpush1.msra.mxu0 %v2462
  %2517 = vmatprep.subr.mxu0 0.0
  %2518 = vmatpush2.msra.mxu0 0.0
  %2519 = vmatprep.subr.mxu0 0.0
  %2520 = vmatpush2.msra.mxu0 0.0
  %2521 = vmatprep.subr.mxu0 0.0
  %2522 = vmatpush2.msra.mxu0 0.0
  %2523 = vmatprep.subr.mxu0 0.0
  %2524 = vmatpush2.msra.mxu0 0.0
  %2525 = vmatprep.subr.mxu0 0.0
  %2526 = vmatpush2.msra.mxu0 0.0
  %2527 = vmatprep.subr.mxu0 0.0
  %2528 = vmatpush2.msra.mxu0 0.0
  %2529 = vmatprep.subr.mxu0 0.0
  %2530 = vmatpush2.msra.mxu0 0.0
  %2531 = vmatprep.subr.mxu0 0.0
  %2532 = vmatpush2.msra.mxu0 0.0
  %2533 = vmatprep.subr.mxu0 0.0
  %2534 = vmatpush2.msra.mxu0 0.0
  %2535 = vmatprep.subr.mxu0 0.0
  %2536 = vmatpush2.msra.mxu0 0.0
  %2537 = vmatprep.subr.mxu0 0.0
  %2538 = vmatpush2.msra.mxu0 0.0
  %2539 = vmatprep.subr.mxu0 0.0
  %2540 = vmatpush2.msra.mxu0 0.0
  %2541 = vmatprep.subr.mxu0 0.0
  %2542 = vmatpush2.msra.mxu0 0.0
  %2543 = vmatprep.subr.mxu0 0.0
  %2544 = vmatpush2.msra.mxu0 0.0
  %2545 = vmatprep.subr.mxu0 0.0
  %2546 = vmatpush2.msra.mxu0 0.0
  %2547 = vmatprep.subr.mxu0 0.0
  %2548 = vmatpush2.msra.mxu0 0.0
  %2549 = vmatprep.mubr.f32.mxu0 0.0
  %2550 = vmatmul.mubr.f32.gmra.mxu0 %v2483
  %v2551 = vpop.f32.mrf.mxu0
  %v2552 = vadd.f32 %v2475, %v2551
  %v2553 = vpop.f32.mrf.mxu0
  %v2554 = vadd.f32 %v2479, %v2553
  %2555 = vdwg.mxu0
  %v2556 = vmax.f32 %v2552, 0.0
  %v2557 = vmax.f32 %v2554, 0.0
  %v2558 = vld [vmem:[%s13] sm:$0xff]
  %v2559 = vld [vmem:[%s13 + $0x8] sm:$0xff]
  %v2560 = vld [vmem:[%s13 + $0x10] sm:$0xff]
  %v2561 = vld [vmem:[%s13 + $0x18] sm:$0xff]
  %v2562 = vld [vmem:[%s13 + $0x20] sm:$0xff]
  %v2563 = vld [vmem:[%s13 + $0x28] sm:$0xff]
  %v2564 = vld [vmem:[%s13 + $0x30] sm:$0xff]
  %v2565 = vld [vmem:[%s13 + $0x38] sm:$0xff]
  %v2566 = vld [vmem:[%s13 + $0x40] sm:$0xff]
  %v2567 = vld [vmem:[%s13 + $0x48] sm:$0xff]
  %v2568 = vld [vmem:[%s13 + $0x50] sm:$0xff]
  %v2569 = vld [vmem:[%s13 + $0x58] sm:$0xff]
  %v2570 = vld [vmem:[%s13 + $0x60] sm:$0xff]
  %v2571 = vld [vmem:[%s13 + $0x68] sm:$0xff]
  %v2572 = vld [vmem:[%s13 + $0x70] sm:$0xff]
  %v2573 = vld [vmem:[%s13 + $0x78] sm:$0xff]
  %v2574 = vld [vmem:[%s13 + $0x80] sm:$0xff]
  %v2575 = vld [vmem:[%s13 + $0x88] sm:$0xff]
  %v2576 = vld [vmem:[%s13 + $0x90] sm:$0xff]
  %v2577 = vld [vmem:[%s13 + $0x98] sm:$0xff]
  %v2578 = vld [vmem:[%s13 + $0xa0] sm:$0xff]
  %v2579 = vld [vmem:[%s13 + $0xa8] sm:$0xff]
  %v2580 = vld [vmem:[%s13 + $0xb0] sm:$0xff]
  %v2581 = vld [vmem:[%s13 + $0xb8] sm:$0xff]
  %v2582 = vld [vmem:[%s13 + $0xc0] sm:$0xff]
  %v2583 = vld [vmem:[%s13 + $0xc8] sm:$0xff]
  %v2584 = vld [vmem:[%s13 + $0xd0] sm:$0xff]
  %v2585 = vld [vmem:[%s13 + $0xd8] sm:$0xff]
  %v2586 = vld [vmem:[%s13 + $0xe0] sm:$0xff]
  %v2587 = vld [vmem:[%s13 + $0xe8] sm:$0xff]
  %v2588 = vld [vmem:[%s13 + $0xf0] sm:$0xff]
  %v2589 = vld [vmem:[%s13 + $0xf8] sm:$0xff]
  %v2590 = vld [vmem:[%s14] sm:$0x1]
  %v2592 = vlaneseq
  %v2593 = vshrl.u32 %v2592, 7
  %v2594 = vsub.s32 0, %v2593
  %v2595 = vrot.slane %v2590, %v2594
  %2597 = vmatprep.subr.mxu0 0.0
  %2598 = vmatpush1.msra.mxu0 %v2573
  %2599 = vmatprep.subr.mxu0 0.0
  %2600 = vmatpush1.msra.mxu0 %v2572
  %2601 = vmatprep.subr.mxu0 0.0
  %2602 = vmatpush1.msra.mxu0 %v2571
  %2603 = vmatprep.subr.mxu0 0.0
  %2604 = vmatpush1.msra.mxu0 %v2570
  %2605 = vmatprep.subr.mxu0 0.0
  %2606 = vmatpush1.msra.mxu0 %v2569
  %2607 = vmatprep.subr.mxu0 0.0
  %2608 = vmatpush1.msra.mxu0 %v2568
  %2609 = vmatprep.subr.mxu0 0.0
  %2610 = vmatpush1.msra.mxu0 %v2567
  %2611 = vmatprep.subr.mxu0 0.0
  %2612 = vmatpush1.msra.mxu0 %v2566
  %2613 = vmatprep.subr.mxu0 0.0
  %2614 = vmatpush1.msra.mxu0 %v2565
  %2615 = vmatprep.subr.mxu0 0.0
  %2616 = vmatpush1.msra.mxu0 %v2564
  %2617 = vmatprep.subr.mxu0 0.0
  %2618 = vmatpush1.msra.mxu0 %v2563
  %2619 = vmatprep.subr.mxu0 0.0
  %2620 = vmatpush1.msra.mxu0 %v2562
  %2621 = vmatprep.subr.mxu0 0.0
  %2622 = vmatpush1.msra.mxu0 %v2561
  %2623 = vmatprep.subr.mxu0 0.0
  %2624 = vmatpush1.msra.mxu0 %v2560
  %2625 = vmatprep.subr.mxu0 0.0
  %2626 = vmatpush1.msra.mxu0 %v2559
  %2627 = vmatprep.subr.mxu0 0.0
  %2628 = vmatpush1.msra.mxu0 %v2558
  %2629 = vmatprep.subr.mxu0 0.0
  %2630 = vmatpush2.msra.mxu0 %v2589
  %2631 = vmatprep.subr.mxu0 0.0
  %2632 = vmatpush2.msra.mxu0 %v2588
  %2633 = vmatprep.subr.mxu0 0.0
  %2634 = vmatpush2.msra.mxu0 %v2587
  %2635 = vmatprep.subr.mxu0 0.0
  %2636 = vmatpush2.msra.mxu0 %v2586
  %2637 = vmatprep.subr.mxu0 0.0
  %2638 = vmatpush2.msra.mxu0 %v2585
  %2639 = vmatprep.subr.mxu0 0.0
  %2640 = vmatpush2.msra.mxu0 %v2584
  %2641 = vmatprep.subr.mxu0 0.0
  %2642 = vmatpush2.msra.mxu0 %v2583
  %2643 = vmatprep.subr.mxu0 0.0
  %2644 = vmatpush2.msra.mxu0 %v2582
  %2645 = vmatprep.subr.mxu0 0.0
  %2646 = vmatpush2.msra.mxu0 %v2581
  %2647 = vmatprep.subr.mxu0 0.0
  %2648 = vmatpush2.msra.mxu0 %v2580
  %2649 = vmatprep.subr.mxu0 0.0
  %2650 = vmatpush2.msra.mxu0 %v2579
  %2651 = vmatprep.subr.mxu0 0.0
  %2652 = vmatpush2.msra.mxu0 %v2578
  %2653 = vmatprep.subr.mxu0 0.0
  %2654 = vmatpush2.msra.mxu0 %v2577
  %2655 = vmatprep.subr.mxu0 0.0
  %2656 = vmatpush2.msra.mxu0 %v2576
  %2657 = vmatprep.subr.mxu0 0.0
  %2658 = vmatpush2.msra.mxu0 %v2575
  %2659 = vmatprep.subr.mxu0 0.0
  %2660 = vmatpush2.msra.mxu0 %v2574
  %2661 = vmatprep.mubr.f32.mxu0 %v2557
  %2662 = vmatmul.mubr.f32.gmra.mxu0 %v2556
  %v2663 = vpop.f32.mrf.mxu0
  %v2664 = vadd.f32 %v2595, %v2663
  %v2665 = vpop.f32.mrf.mxu0
  %2666 = vdwg.mxu0
  %v2667 = vmax.f32 %v2664, 0.0
  %v2668 = vld [vmem:[%s15] sm:$0xff]
  %v2669 = vld [vmem:[%s15 + $0x8] sm:$0xff]
  %v2670 = vld [vmem:[%s15 + $0x10] sm:$0xff]
  %v2671 = vld [vmem:[%s15 + $0x18] sm:$0xff]
  %v2672 = vld [vmem:[%s15 + $0x20] sm:$0xff]
  %v2673 = vld [vmem:[%s15 + $0x28] sm:$0xff]
  %v2674 = vld [vmem:[%s15 + $0x30] sm:$0xff]
  %v2675 = vld [vmem:[%s15 + $0x38] sm:$0xff]
  %v2676 = vld [vmem:[%s16] sm:$0x1]
  %v2678 = vlaneseq
  %v2679 = vshrl.u32 %v2678, 7
  %v2680 = vsub.s32 0, %v2679
  %v2681 = vrot.slane %v2676, %v2680
  %v2684 = vsel %vm811, %v2667, 0
  %2686 = vmatprep.subr.mxu0 0.0
  %2687 = vmatpush1.msra.mxu0 0.0
  %2688 = vmatprep.subr.mxu0 0.0
  %2689 = vmatpush1.msra.mxu0 0.0
  %2690 = vmatprep.subr.mxu0 0.0
  %2691 = vmatpush1.msra.mxu0 0.0
  %2692 = vmatprep.subr.mxu0 0.0
  %2693 = vmatpush1.msra.mxu0 0.0
  %2694 = vmatprep.subr.mxu0 0.0
  %2695 = vmatpush1.msra.mxu0 0.0
  %2696 = vmatprep.subr.mxu0 0.0
  %2697 = vmatpush1.msra.mxu0 0.0
  %2698 = vmatprep.subr.mxu0 0.0
  %2699 = vmatpush1.msra.mxu0 0.0
  %2700 = vmatprep.subr.mxu0 0.0
  %2701 = vmatpush1.msra.mxu0 0.0
  %2702 = vmatprep.subr.mxu0 0.0
  %2703 = vmatpush1.msra.mxu0 %v2675
  %2704 = vmatprep.subr.mxu0 0.0
  %2705 = vmatpush1.msra.mxu0 %v2674
  %2706 = vmatprep.subr.mxu0 0.0
  %2707 = vmatpush1.msra.mxu0 %v2673
  %2708 = vmatprep.subr.mxu0 0.0
  %2709 = vmatpush1.msra.mxu0 %v2672
  %2710 = vmatprep.subr.mxu0 0.0
  %2711 = vmatpush1.msra.mxu0 %v2671
  %2712 = vmatprep.subr.mxu0 0.0
  %2713 = vmatpush1.msra.mxu0 %v2670
  %2714 = vmatprep.subr.mxu0 0.0
  %2715 = vmatpush1.msra.mxu0 %v2669
  %2716 = vmatprep.subr.mxu0 0.0
  %2717 = vmatpush1.msra.mxu0 %v2668
  %2718 = vmatprep.subr.mxu0 0.0
  %2719 = vmatpush2.msra.mxu0 0.0
  %2720 = vmatprep.subr.mxu0 0.0
  %2721 = vmatpush2.msra.mxu0 0.0
  %2722 = vmatprep.subr.mxu0 0.0
  %2723 = vmatpush2.msra.mxu0 0.0
  %2724 = vmatprep.subr.mxu0 0.0
  %2725 = vmatpush2.msra.mxu0 0.0
  %2726 = vmatprep.subr.mxu0 0.0
  %2727 = vmatpush2.msra.mxu0 0.0
  %2728 = vmatprep.subr.mxu0 0.0
  %2729 = vmatpush2.msra.mxu0 0.0
  %2730 = vmatprep.subr.mxu0 0.0
  %2731 = vmatpush2.msra.mxu0 0.0
  %2732 = vmatprep.subr.mxu0 0.0
  %2733 = vmatpush2.msra.mxu0 0.0
  %2734 = vmatprep.subr.mxu0 0.0
  %2735 = vmatpush2.msra.mxu0 0.0
  %2736 = vmatprep.subr.mxu0 0.0
  %2737 = vmatpush2.msra.mxu0 0.0
  %2738 = vmatprep.subr.mxu0 0.0
  %2739 = vmatpush2.msra.mxu0 0.0
  %2740 = vmatprep.subr.mxu0 0.0
  %2741 = vmatpush2.msra.mxu0 0.0
  %2742 = vmatprep.subr.mxu0 0.0
  %2743 = vmatpush2.msra.mxu0 0.0
  %2744 = vmatprep.subr.mxu0 0.0
  %2745 = vmatpush2.msra.mxu0 0.0
  %2746 = vmatprep.subr.mxu0 0.0
  %2747 = vmatpush2.msra.mxu0 0.0
  %2748 = vmatprep.subr.mxu0 0.0
  %2749 = vmatpush2.msra.mxu0 0.0
  %2750 = vmatprep.mubr.f32.mxu0 0.0
  %2751 = vmatmul.mubr.f32.gmra.mxu0 %v2684
  %v2752 = vpop.f32.mrf.mxu0
  %v2753 = vadd.f32 %v2681, %v2752
  %v2754 = vpop.f32.mrf.mxu0
  %2755 = vdwg.mxu0
  %2756 = vst [vmem:[%s17] sm:$0x3] %v2753
  // Predicated region
  $region70: #{gnn_forward.1} parent=0 // pred_check
    _
  $region71: #{gnn_forward.1} parent=0 // pred_check_branch
    %2758 = sbr.rel (0) target = $region73
  $region72: #{gnn_forward.1} parent=0 // pred_region
    _
  $region73: #{gnn_forward.1} parent=0 // pred_fallthru
    _
  // Predicated region
  $region74: #{gnn_forward.1} parent=0 // pred_check
    _
  $region75: #{gnn_forward.1} parent=0 // pred_check_branch
    %2760 = sbr.rel (0) target = $region77
  $region76: #{gnn_forward.1} parent=0 // pred_region
    _
  $region77: #{gnn_forward.1} parent=0 // pred_fallthru
    _

</llo_original>
